<compile_context>
chip_gen: v6e
topology: v6e:2x2x1
jax: 0.10.0
libtpu: 0.0.40
codegen_flags: <defaults>
</compile_context>

<pallas_src>
import jax
import jax.numpy as jnp
from jax import lax
from jax.experimental import pallas as pl
from jax.experimental.pallas import tpu as pltpu


def _mha_kernel(x_ref, wq_ref, wk_ref, wv_ref, bq_ref, bk_ref, bv_ref,
                wo_ref, bo_ref, o_ref):
    block_b, n, d = x_ref.shape
    num_heads, _, head_dim = wq_ref.shape

    for b in range(block_b):                       # static unroll over batch block
        xb = x_ref[b].astype(jnp.bfloat16)         # (N, D) bf16 operand, cast once

        # f32 accumulator for the output projection (replaces concat + big matmul).
        acc = jnp.zeros((n, d), dtype=jnp.float32)

        for h in range(num_heads):
            # Per-head projections: (N, D) @ (D, hd) -> (N, hd), f32 accumulate.
            # The 1/sqrt(hd) scaling is already folded into wq/bq by the wrapper.
            q = jnp.dot(xb, wq_ref[h], preferred_element_type=jnp.float32) + bq_ref[h]
            k = jnp.dot(xb, wk_ref[h], preferred_element_type=jnp.float32) + bk_ref[h]
            v = jnp.dot(xb, wv_ref[h], preferred_element_type=jnp.float32) + bv_ref[h]

            # Scores: contract the last dim of both operands (no explicit k.T).
            s = lax.dot_general(
                q.astype(jnp.bfloat16), k.astype(jnp.bfloat16),
                dimension_numbers=(((1,), (1,)), ((), ())),
                preferred_element_type=jnp.float32)            # (N, N)

            # Numerically-stable softmax; stats in f32, divide on the EUP.
            s = s - jnp.max(s, axis=-1, keepdims=True)
            p = jnp.exp(s)
            p = p * pl.reciprocal(jnp.sum(p, axis=-1, keepdims=True), approx=True)
            # TODO(synk): attn_dropout is identity at inference (training-only);
            # dropout is not implemented in the kernel.

            ctx = jnp.dot(p.astype(jnp.bfloat16), v.astype(jnp.bfloat16),
                          preferred_element_type=jnp.float32)  # (N, hd)

            # Per-head slice of the pre-transposed out projection: (hd, D).
            acc = acc + jnp.dot(ctx.astype(jnp.bfloat16), wo_ref[h],
                                preferred_element_type=jnp.float32)

        o_ref[b] = (acc + bo_ref[...]).astype(o_ref.dtype)     # bias added once


def _choose_block_b(B, N, D, num_heads):
    """Batch elements per grid step: fit a conservative VMEM budget, keep a
    divisor of B, and expose >= 2 parallel grid steps when possible (v7x has
    2 TensorCores; v5e's scoped VMEM default is only 16 MiB)."""
    lane = 128
    per_b = (2 * N * max(D, lane) * 4          # x tile + out tile
             + 3 * N * lane * 4                # q, k, v (hd lanes padded to 128)
             + 2 * N * max(N, lane) * 4        # scores + probs
             + N * max(D, lane) * 4)           # out-proj accumulator
    budget = 8 << 20
    bb = int(max(1, min(B, budget // max(per_b, 1), 8)))
    while bb > 1 and (B % bb != 0 or B // bb < 2):
        bb -= 1
    return bb


def multi_head_attention(x, wqkv, bqkv, wo, bo, *, num_heads):
    B, N, D = x.shape
    if D % num_heads != 0:
        raise ValueError("embed_dim must be divisible by num_heads")
    hd = D // num_heads
    scaling = hd ** (-0.5)

    # ---- one-time layout plumbing (outside the kernel, plain XLA) ----
    # qkv_proj weight rows are ordered [qkv_idx, head, head_dim] (matches the
    # PyTorch reshape(b, n, 3, H, hd)).
    w3 = wqkv.reshape(3, num_heads, hd, D)
    b3 = bqkv.reshape(3, num_heads, hd)
    wq = (jnp.transpose(w3[0], (0, 2, 1)) * scaling).astype(jnp.bfloat16)  # (H, D, hd)
    wk = jnp.transpose(w3[1], (0, 2, 1)).astype(jnp.bfloat16)              # (H, D, hd)
    wv = jnp.transpose(w3[2], (0, 2, 1)).astype(jnp.bfloat16)              # (H, D, hd)
    bq = (b3[0] * scaling)[:, None, :].astype(jnp.float32)                 # (H, 1, hd)
    bk = b3[1][:, None, :].astype(jnp.float32)                             # (H, 1, hd)
    bv = b3[2][:, None, :].astype(jnp.float32)                             # (H, 1, hd)
    wo_h = jnp.transpose(wo, (1, 0)).reshape(num_heads, hd, D).astype(jnp.bfloat16)
    bo_r = bo.reshape(1, D).astype(jnp.float32)                            # (1, D)

    block_b = _choose_block_b(B, N, D, num_heads)
    grid_b = B // block_b

    return pl.pallas_call(
        _mha_kernel,
        out_shape=jax.ShapeDtypeStruct((B, N, D), x.dtype),
        grid_spec=pltpu.PrefetchScalarGridSpec(
            num_scalar_prefetch=0,
            grid=(grid_b,),
            in_specs=[
                pl.BlockSpec((block_b, N, D), lambda b: (b, 0, 0)),       # x
                pl.BlockSpec((num_heads, D, hd), lambda b: (0, 0, 0)),    # wq (scaled)
                pl.BlockSpec((num_heads, D, hd), lambda b: (0, 0, 0)),    # wk
                pl.BlockSpec((num_heads, D, hd), lambda b: (0, 0, 0)),    # wv
                pl.BlockSpec((num_heads, 1, hd), lambda b: (0, 0, 0)),    # bq (scaled)
                pl.BlockSpec((num_heads, 1, hd), lambda b: (0, 0, 0)),    # bk
                pl.BlockSpec((num_heads, 1, hd), lambda b: (0, 0, 0)),    # bv
                pl.BlockSpec((num_heads, hd, D), lambda b: (0, 0, 0)),    # wo per head
                pl.BlockSpec((1, D), lambda b: (0, 0)),                   # bo
            ],
            out_specs=pl.BlockSpec((block_b, N, D), lambda b: (b, 0, 0)),
        ),
        compiler_params=pltpu.CompilerParams(
            dimension_semantics=("parallel",),
            vmem_limit_bytes=32 * 1024 * 1024),
    )(x, wq, wk, wv, bq, bk, bv, wo_h, bo_r)


def _reference(x, wqkv, bqkv, wo, bo, *, num_heads):
    B, N, D = x.shape
    hd = D // num_heads
    qkv = jnp.einsum("bnd,ed->bne", x, wqkv) + bqkv              # (B, N, 3D)
    qkv = qkv.reshape(B, N, 3, num_heads, hd)
    qkv = jnp.transpose(qkv, (0, 3, 2, 1, 4))                    # (B, H, 3, N, hd)
    q, k, v = qkv[:, :, 0], qkv[:, :, 1], qkv[:, :, 2]
    q = q * (hd ** -0.5)
    attn = jnp.einsum("bhqd,bhkd->bhqk", q, k)
    attn = jax.nn.softmax(attn, axis=-1)
    out = jnp.einsum("bhqk,bhkd->bhqd", attn, v)
    out = jnp.transpose(out, (0, 2, 1, 3)).reshape(B, N, D)
    return jnp.einsum("bnd,ed->bne", out, wo) + bo


if __name__ == "__main__":
    # Small shapes consistent with the module: embed_dim divisible by num_heads.
    B, N, D = 2, 16, 32
    num_heads = 4

    key = jax.random.PRNGKey(0)
    kx, k1, k2, k3, k4 = jax.random.split(key, 5)

    x = jax.random.normal(kx, (B, N, D), dtype=jnp.float32)
    # Deterministic "Linear" parameter init (synthetic, not a checkpoint load).
    wqkv = jax.random.normal(k1, (3 * D, D), dtype=jnp.float32) * 0.05
    bqkv = jax.random.normal(k2, (3 * D,), dtype=jnp.float32) * 0.05
    wo = jax.random.normal(k3, (D, D), dtype=jnp.float32) * 0.05
    bo = jax.random.normal(k4, (D,), dtype=jnp.float32) * 0.05

    out = multi_head_attention(x, wqkv, bqkv, wo, bo, num_heads=num_heads)
    out = jax.block_until_ready(out)

    ref = _reference(x, wqkv, bqkv, wo, bo, num_heads=num_heads)
    assert out.shape == (B, N, D)
    # bf16 matmul operands (f32 accumulation) -> slightly looser tolerance.
    assert jnp.allclose(out, ref, atol=2e-2, rtol=2e-2), "mismatch vs reference"

    print("KERNEL_OK")
</pallas_src>

<mosaic_0001>
module attributes {stable_mosaic.version = 11 : i64} {
  func.func @_mha_kernel(%arg0: i32, %arg1: memref<1x16x32xf32, #tpu.memory_space<vmem>>, %arg2: memref<4x32x8xbf16, #tpu.memory_space<vmem>>, %arg3: memref<4x32x8xbf16, #tpu.memory_space<vmem>>, %arg4: memref<4x32x8xbf16, #tpu.memory_space<vmem>>, %arg5: memref<4x1x8xf32, #tpu.memory_space<vmem>>, %arg6: memref<4x1x8xf32, #tpu.memory_space<vmem>>, %arg7: memref<4x1x8xf32, #tpu.memory_space<vmem>>, %arg8: memref<4x8x32xbf16, #tpu.memory_space<vmem>>, %arg9: memref<1x32xf32, #tpu.memory_space<vmem>>, %arg10: memref<1x16x32xf32, #tpu.memory_space<vmem>>) attributes {dimension_semantics = [#tpu.dimension_semantics<parallel>], iteration_bounds = array<i64: 2>, scalar_prefetch = 0 : i64, scratch_operands = 0 : i64, tpu.core_type = #tpu.core_type<tc>, window_params = [{transform_indices = @transform_0, window_bounds = array<i64: 1, 16, 32>}, {pipeline_mode = #tpu.pipeline_mode<synchronous>, transform_indices = @transform_1, window_bounds = array<i64: 4, 32, 8>}, {pipeline_mode = #tpu.pipeline_mode<synchronous>, transform_indices = @transform_2, window_bounds = array<i64: 4, 32, 8>}, {pipeline_mode = #tpu.pipeline_mode<synchronous>, transform_indices = @transform_3, window_bounds = array<i64: 4, 32, 8>}, {pipeline_mode = #tpu.pipeline_mode<synchronous>, transform_indices = @transform_4, window_bounds = array<i64: 4, 1, 8>}, {pipeline_mode = #tpu.pipeline_mode<synchronous>, transform_indices = @transform_5, window_bounds = array<i64: 4, 1, 8>}, {pipeline_mode = #tpu.pipeline_mode<synchronous>, transform_indices = @transform_6, window_bounds = array<i64: 4, 1, 8>}, {pipeline_mode = #tpu.pipeline_mode<synchronous>, transform_indices = @transform_7, window_bounds = array<i64: 4, 8, 32>}, {pipeline_mode = #tpu.pipeline_mode<synchronous>, transform_indices = @transform_8, window_bounds = array<i64: 1, 32>}, {transform_indices = @transform_9, window_bounds = array<i64: 1, 16, 32>}]} {
    %c0 = arith.constant 0 : index
    %c0_0 = arith.constant 0 : index
    %c0_1 = arith.constant 0 : index
    %0 = vector.load %arg1[%c0, %c0_0, %c0_1] : memref<1x16x32xf32, #tpu.memory_space<vmem>>, vector<1x16x32xf32>
    %1 = vector.shape_cast %0 : vector<1x16x32xf32> to vector<16x32xf32>
    %2 = arith.truncf %1 : vector<16x32xf32> to vector<16x32xbf16>
    %cst = arith.constant 0.000000e+00 : f32
    %3 = vector.broadcast %cst : f32 to vector<16x32xf32>
    %c0_2 = arith.constant 0 : index
    %c0_3 = arith.constant 0 : index
    %c0_4 = arith.constant 0 : index
    %4 = vector.load %arg2[%c0_2, %c0_3, %c0_4] : memref<4x32x8xbf16, #tpu.memory_space<vmem>>, vector<1x32x8xbf16>
    %5 = vector.shape_cast %4 : vector<1x32x8xbf16> to vector<32x8xbf16>
    %cst_5 = arith.constant dense<0.000000e+00> : vector<16x8xf32>
    %6 = tpu.matmul %2, %5, %cst_5 {dimension_numbers = #tpu.dot_dimension_numbers<[1], [0], [0], [1], [0, 0, 1, 1], [], []>} : vector<16x32xbf16>, vector<32x8xbf16>, vector<16x8xf32> -> vector<16x8xf32>
    %c0_6 = arith.constant 0 : index
    %c0_7 = arith.constant 0 : index
    %c0_8 = arith.constant 0 : index
    %7 = vector.load %arg5[%c0_6, %c0_7, %c0_8] : memref<4x1x8xf32, #tpu.memory_space<vmem>>, vector<1x1x8xf32>
    %8 = vector.shape_cast %7 : vector<1x1x8xf32> to vector<1x8xf32>
    %9 = vector.broadcast %8 : vector<1x8xf32> to vector<16x8xf32>
    %10 = arith.addf %6, %9 : vector<16x8xf32>
    %c0_9 = arith.constant 0 : index
    %c0_10 = arith.constant 0 : index
    %c0_11 = arith.constant 0 : index
    %11 = vector.load %arg3[%c0_9, %c0_10, %c0_11] : memref<4x32x8xbf16, #tpu.memory_space<vmem>>, vector<1x32x8xbf16>
    %12 = vector.shape_cast %11 : vector<1x32x8xbf16> to vector<32x8xbf16>
    %cst_12 = arith.constant dense<0.000000e+00> : vector<16x8xf32>
    %13 = tpu.matmul %2, %12, %cst_12 {dimension_numbers = #tpu.dot_dimension_numbers<[1], [0], [0], [1], [0, 0, 1, 1], [], []>} : vector<16x32xbf16>, vector<32x8xbf16>, vector<16x8xf32> -> vector<16x8xf32>
    %c0_13 = arith.constant 0 : index
    %c0_14 = arith.constant 0 : index
    %c0_15 = arith.constant 0 : index
    %14 = vector.load %arg6[%c0_13, %c0_14, %c0_15] : memref<4x1x8xf32, #tpu.memory_space<vmem>>, vector<1x1x8xf32>
    %15 = vector.shape_cast %14 : vector<1x1x8xf32> to vector<1x8xf32>
    %16 = vector.broadcast %15 : vector<1x8xf32> to vector<16x8xf32>
    %17 = arith.addf %13, %16 : vector<16x8xf32>
    %c0_16 = arith.constant 0 : index
    %c0_17 = arith.constant 0 : index
    %c0_18 = arith.constant 0 : index
    %18 = vector.load %arg4[%c0_16, %c0_17, %c0_18] : memref<4x32x8xbf16, #tpu.memory_space<vmem>>, vector<1x32x8xbf16>
    %19 = vector.shape_cast %18 : vector<1x32x8xbf16> to vector<32x8xbf16>
    %cst_19 = arith.constant dense<0.000000e+00> : vector<16x8xf32>
    %20 = tpu.matmul %2, %19, %cst_19 {dimension_numbers = #tpu.dot_dimension_numbers<[1], [0], [0], [1], [0, 0, 1, 1], [], []>} : vector<16x32xbf16>, vector<32x8xbf16>, vector<16x8xf32> -> vector<16x8xf32>
    %c0_20 = arith.constant 0 : index
    %c0_21 = arith.constant 0 : index
    %c0_22 = arith.constant 0 : index
    %21 = vector.load %arg7[%c0_20, %c0_21, %c0_22] : memref<4x1x8xf32, #tpu.memory_space<vmem>>, vector<1x1x8xf32>
    %22 = vector.shape_cast %21 : vector<1x1x8xf32> to vector<1x8xf32>
    %23 = vector.broadcast %22 : vector<1x8xf32> to vector<16x8xf32>
    %24 = arith.addf %20, %23 : vector<16x8xf32>
    %25 = arith.truncf %10 : vector<16x8xf32> to vector<16x8xbf16>
    %26 = arith.truncf %17 : vector<16x8xf32> to vector<16x8xbf16>
    %cst_23 = arith.constant dense<0.000000e+00> : vector<16x16xf32>
    %27 = tpu.matmul %25, %26, %cst_23 {dimension_numbers = #tpu.dot_dimension_numbers<[1], [1], [0], [0], [0, 0, 1, 0], [], []>} : vector<16x8xbf16>, vector<16x8xbf16>, vector<16x16xf32> -> vector<16x16xf32>
    %cst_24 = arith.constant dense<0xFF800000> : vector<16xf32>
    %28 = vector.multi_reduction <maximumf>, %27, %cst_24 [1] : vector<16x16xf32> to vector<16xf32>
    %29 = vector.shape_cast %28 : vector<16xf32> to vector<16x1xf32>
    %30 = vector.broadcast %29 : vector<16x1xf32> to vector<16x16xf32>
    %31 = arith.subf %27, %30 : vector<16x16xf32>
    %32 = math.exp %31 : vector<16x16xf32>
    %cst_25 = arith.constant dense<0.000000e+00> : vector<16xf32>
    %33 = vector.multi_reduction <add>, %32, %cst_25 [1] : vector<16x16xf32> to vector<16xf32>
    %34 = vector.shape_cast %33 : vector<16xf32> to vector<16x1xf32>
    %35 = tpu.reciprocal %34 {approx = true} : vector<16x1xf32> -> vector<16x1xf32>
    %36 = vector.broadcast %35 : vector<16x1xf32> to vector<16x16xf32>
    %37 = arith.mulf %32, %36 : vector<16x16xf32>
    %38 = arith.truncf %37 : vector<16x16xf32> to vector<16x16xbf16>
    %39 = arith.truncf %24 : vector<16x8xf32> to vector<16x8xbf16>
    %cst_26 = arith.constant dense<0.000000e+00> : vector<16x8xf32>
    %40 = tpu.matmul %38, %39, %cst_26 {dimension_numbers = #tpu.dot_dimension_numbers<[1], [0], [0], [1], [0, 0, 1, 1], [], []>} : vector<16x16xbf16>, vector<16x8xbf16>, vector<16x8xf32> -> vector<16x8xf32>
    %41 = arith.truncf %40 : vector<16x8xf32> to vector<16x8xbf16>
    %c0_27 = arith.constant 0 : index
    %c0_28 = arith.constant 0 : index
    %c0_29 = arith.constant 0 : index
    %42 = vector.load %arg8[%c0_27, %c0_28, %c0_29] : memref<4x8x32xbf16, #tpu.memory_space<vmem>>, vector<1x8x32xbf16>
    %43 = vector.shape_cast %42 : vector<1x8x32xbf16> to vector<8x32xbf16>
    %cst_30 = arith.constant dense<0.000000e+00> : vector<16x32xf32>
    %44 = tpu.matmul %41, %43, %cst_30 {dimension_numbers = #tpu.dot_dimension_numbers<[1], [0], [0], [1], [0, 0, 1, 1], [], []>} : vector<16x8xbf16>, vector<8x32xbf16>, vector<16x32xf32> -> vector<16x32xf32>
    %45 = arith.addf %3, %44 : vector<16x32xf32>
    %c1 = arith.constant 1 : index
    %c0_31 = arith.constant 0 : index
    %c0_32 = arith.constant 0 : index
    %46 = vector.load %arg2[%c1, %c0_31, %c0_32] : memref<4x32x8xbf16, #tpu.memory_space<vmem>>, vector<1x32x8xbf16>
    %47 = vector.shape_cast %46 : vector<1x32x8xbf16> to vector<32x8xbf16>
    %cst_33 = arith.constant dense<0.000000e+00> : vector<16x8xf32>
    %48 = tpu.matmul %2, %47, %cst_33 {dimension_numbers = #tpu.dot_dimension_numbers<[1], [0], [0], [1], [0, 0, 1, 1], [], []>} : vector<16x32xbf16>, vector<32x8xbf16>, vector<16x8xf32> -> vector<16x8xf32>
    %c1_34 = arith.constant 1 : index
    %c0_35 = arith.constant 0 : index
    %c0_36 = arith.constant 0 : index
    %49 = vector.load %arg5[%c1_34, %c0_35, %c0_36] : memref<4x1x8xf32, #tpu.memory_space<vmem>>, vector<1x1x8xf32>
    %50 = vector.shape_cast %49 : vector<1x1x8xf32> to vector<1x8xf32>
    %51 = vector.broadcast %50 : vector<1x8xf32> to vector<16x8xf32>
    %52 = arith.addf %48, %51 : vector<16x8xf32>
    %c1_37 = arith.constant 1 : index
    %c0_38 = arith.constant 0 : index
    %c0_39 = arith.constant 0 : index
    %53 = vector.load %arg3[%c1_37, %c0_38, %c0_39] : memref<4x32x8xbf16, #tpu.memory_space<vmem>>, vector<1x32x8xbf16>
    %54 = vector.shape_cast %53 : vector<1x32x8xbf16> to vector<32x8xbf16>
    %cst_40 = arith.constant dense<0.000000e+00> : vector<16x8xf32>
    %55 = tpu.matmul %2, %54, %cst_40 {dimension_numbers = #tpu.dot_dimension_numbers<[1], [0], [0], [1], [0, 0, 1, 1], [], []>} : vector<16x32xbf16>, vector<32x8xbf16>, vector<16x8xf32> -> vector<16x8xf32>
    %c1_41 = arith.constant 1 : index
    %c0_42 = arith.constant 0 : index
    %c0_43 = arith.constant 0 : index
    %56 = vector.load %arg6[%c1_41, %c0_42, %c0_43] : memref<4x1x8xf32, #tpu.memory_space<vmem>>, vector<1x1x8xf32>
    %57 = vector.shape_cast %56 : vector<1x1x8xf32> to vector<1x8xf32>
    %58 = vector.broadcast %57 : vector<1x8xf32> to vector<16x8xf32>
    %59 = arith.addf %55, %58 : vector<16x8xf32>
    %c1_44 = arith.constant 1 : index
    %c0_45 = arith.constant 0 : index
    %c0_46 = arith.constant 0 : index
    %60 = vector.load %arg4[%c1_44, %c0_45, %c0_46] : memref<4x32x8xbf16, #tpu.memory_space<vmem>>, vector<1x32x8xbf16>
    %61 = vector.shape_cast %60 : vector<1x32x8xbf16> to vector<32x8xbf16>
    %cst_47 = arith.constant dense<0.000000e+00> : vector<16x8xf32>
    %62 = tpu.matmul %2, %61, %cst_47 {dimension_numbers = #tpu.dot_dimension_numbers<[1], [0], [0], [1], [0, 0, 1, 1], [], []>} : vector<16x32xbf16>, vector<32x8xbf16>, vector<16x8xf32> -> vector<16x8xf32>
    %c1_48 = arith.constant 1 : index
    %c0_49 = arith.constant 0 : index
    %c0_50 = arith.constant 0 : index
    %63 = vector.load %arg7[%c1_48, %c0_49, %c0_50] : memref<4x1x8xf32, #tpu.memory_space<vmem>>, vector<1x1x8xf32>
    %64 = vector.shape_cast %63 : vector<1x1x8xf32> to vector<1x8xf32>
    %65 = vector.broadcast %64 : vector<1x8xf32> to vector<16x8xf32>
    %66 = arith.addf %62, %65 : vector<16x8xf32>
    %67 = arith.truncf %52 : vector<16x8xf32> to vector<16x8xbf16>
    %68 = arith.truncf %59 : vector<16x8xf32> to vector<16x8xbf16>
    %cst_51 = arith.constant dense<0.000000e+00> : vector<16x16xf32>
    %69 = tpu.matmul %67, %68, %cst_51 {dimension_numbers = #tpu.dot_dimension_numbers<[1], [1], [0], [0], [0, 0, 1, 0], [], []>} : vector<16x8xbf16>, vector<16x8xbf16>, vector<16x16xf32> -> vector<16x16xf32>
    %cst_52 = arith.constant dense<0xFF800000> : vector<16xf32>
    %70 = vector.multi_reduction <maximumf>, %69, %cst_52 [1] : vector<16x16xf32> to vector<16xf32>
    %71 = vector.shape_cast %70 : vector<16xf32> to vector<16x1xf32>
    %72 = vector.broadcast %71 : vector<16x1xf32> to vector<16x16xf32>
    %73 = arith.subf %69, %72 : vector<16x16xf32>
    %74 = math.exp %73 : vector<16x16xf32>
    %cst_53 = arith.constant dense<0.000000e+00> : vector<16xf32>
    %75 = vector.multi_reduction <add>, %74, %cst_53 [1] : vector<16x16xf32> to vector<16xf32>
    %76 = vector.shape_cast %75 : vector<16xf32> to vector<16x1xf32>
    %77 = tpu.reciprocal %76 {approx = true} : vector<16x1xf32> -> vector<16x1xf32>
    %78 = vector.broadcast %77 : vector<16x1xf32> to vector<16x16xf32>
    %79 = arith.mulf %74, %78 : vector<16x16xf32>
    %80 = arith.truncf %79 : vector<16x16xf32> to vector<16x16xbf16>
    %81 = arith.truncf %66 : vector<16x8xf32> to vector<16x8xbf16>
    %cst_54 = arith.constant dense<0.000000e+00> : vector<16x8xf32>
    %82 = tpu.matmul %80, %81, %cst_54 {dimension_numbers = #tpu.dot_dimension_numbers<[1], [0], [0], [1], [0, 0, 1, 1], [], []>} : vector<16x16xbf16>, vector<16x8xbf16>, vector<16x8xf32> -> vector<16x8xf32>
    %83 = arith.truncf %82 : vector<16x8xf32> to vector<16x8xbf16>
    %c1_55 = arith.constant 1 : index
    %c0_56 = arith.constant 0 : index
    %c0_57 = arith.constant 0 : index
    %84 = vector.load %arg8[%c1_55, %c0_56, %c0_57] : memref<4x8x32xbf16, #tpu.memory_space<vmem>>, vector<1x8x32xbf16>
    %85 = vector.shape_cast %84 : vector<1x8x32xbf16> to vector<8x32xbf16>
    %cst_58 = arith.constant dense<0.000000e+00> : vector<16x32xf32>
    %86 = tpu.matmul %83, %85, %cst_58 {dimension_numbers = #tpu.dot_dimension_numbers<[1], [0], [0], [1], [0, 0, 1, 1], [], []>} : vector<16x8xbf16>, vector<8x32xbf16>, vector<16x32xf32> -> vector<16x32xf32>
    %87 = arith.addf %45, %86 : vector<16x32xf32>
    %c2 = arith.constant 2 : index
    %c0_59 = arith.constant 0 : index
    %c0_60 = arith.constant 0 : index
    %88 = vector.load %arg2[%c2, %c0_59, %c0_60] : memref<4x32x8xbf16, #tpu.memory_space<vmem>>, vector<1x32x8xbf16>
    %89 = vector.shape_cast %88 : vector<1x32x8xbf16> to vector<32x8xbf16>
    %cst_61 = arith.constant dense<0.000000e+00> : vector<16x8xf32>
    %90 = tpu.matmul %2, %89, %cst_61 {dimension_numbers = #tpu.dot_dimension_numbers<[1], [0], [0], [1], [0, 0, 1, 1], [], []>} : vector<16x32xbf16>, vector<32x8xbf16>, vector<16x8xf32> -> vector<16x8xf32>
    %c2_62 = arith.constant 2 : index
    %c0_63 = arith.constant 0 : index
    %c0_64 = arith.constant 0 : index
    %91 = vector.load %arg5[%c2_62, %c0_63, %c0_64] : memref<4x1x8xf32, #tpu.memory_space<vmem>>, vector<1x1x8xf32>
    %92 = vector.shape_cast %91 : vector<1x1x8xf32> to vector<1x8xf32>
    %93 = vector.broadcast %92 : vector<1x8xf32> to vector<16x8xf32>
    %94 = arith.addf %90, %93 : vector<16x8xf32>
    %c2_65 = arith.constant 2 : index
    %c0_66 = arith.constant 0 : index
    %c0_67 = arith.constant 0 : index
    %95 = vector.load %arg3[%c2_65, %c0_66, %c0_67] : memref<4x32x8xbf16, #tpu.memory_space<vmem>>, vector<1x32x8xbf16>
    %96 = vector.shape_cast %95 : vector<1x32x8xbf16> to vector<32x8xbf16>
    %cst_68 = arith.constant dense<0.000000e+00> : vector<16x8xf32>
    %97 = tpu.matmul %2, %96, %cst_68 {dimension_numbers = #tpu.dot_dimension_numbers<[1], [0], [0], [1], [0, 0, 1, 1], [], []>} : vector<16x32xbf16>, vector<32x8xbf16>, vector<16x8xf32> -> vector<16x8xf32>
    %c2_69 = arith.constant 2 : index
    %c0_70 = arith.constant 0 : index
    %c0_71 = arith.constant 0 : index
    %98 = vector.load %arg6[%c2_69, %c0_70, %c0_71] : memref<4x1x8xf32, #tpu.memory_space<vmem>>, vector<1x1x8xf32>
    %99 = vector.shape_cast %98 : vector<1x1x8xf32> to vector<1x8xf32>
    %100 = vector.broadcast %99 : vector<1x8xf32> to vector<16x8xf32>
    %101 = arith.addf %97, %100 : vector<16x8xf32>
    %c2_72 = arith.constant 2 : index
    %c0_73 = arith.constant 0 : index
    %c0_74 = arith.constant 0 : index
    %102 = vector.load %arg4[%c2_72, %c0_73, %c0_74] : memref<4x32x8xbf16, #tpu.memory_space<vmem>>, vector<1x32x8xbf16>
    %103 = vector.shape_cast %102 : vector<1x32x8xbf16> to vector<32x8xbf16>
    %cst_75 = arith.constant dense<0.000000e+00> : vector<16x8xf32>
    %104 = tpu.matmul %2, %103, %cst_75 {dimension_numbers = #tpu.dot_dimension_numbers<[1], [0], [0], [1], [0, 0, 1, 1], [], []>} : vector<16x32xbf16>, vector<32x8xbf16>, vector<16x8xf32> -> vector<16x8xf32>
    %c2_76 = arith.constant 2 : index
    %c0_77 = arith.constant 0 : index
    %c0_78 = arith.constant 0 : index
    %105 = vector.load %arg7[%c2_76, %c0_77, %c0_78] : memref<4x1x8xf32, #tpu.memory_space<vmem>>, vector<1x1x8xf32>
    %106 = vector.shape_cast %105 : vector<1x1x8xf32> to vector<1x8xf32>
    %107 = vector.broadcast %106 : vector<1x8xf32> to vector<16x8xf32>
    %108 = arith.addf %104, %107 : vector<16x8xf32>
    %109 = arith.truncf %94 : vector<16x8xf32> to vector<16x8xbf16>
    %110 = arith.truncf %101 : vector<16x8xf32> to vector<16x8xbf16>
    %cst_79 = arith.constant dense<0.000000e+00> : vector<16x16xf32>
    %111 = tpu.matmul %109, %110, %cst_79 {dimension_numbers = #tpu.dot_dimension_numbers<[1], [1], [0], [0], [0, 0, 1, 0], [], []>} : vector<16x8xbf16>, vector<16x8xbf16>, vector<16x16xf32> -> vector<16x16xf32>
    %cst_80 = arith.constant dense<0xFF800000> : vector<16xf32>
    %112 = vector.multi_reduction <maximumf>, %111, %cst_80 [1] : vector<16x16xf32> to vector<16xf32>
    %113 = vector.shape_cast %112 : vector<16xf32> to vector<16x1xf32>
    %114 = vector.broadcast %113 : vector<16x1xf32> to vector<16x16xf32>
    %115 = arith.subf %111, %114 : vector<16x16xf32>
    %116 = math.exp %115 : vector<16x16xf32>
    %cst_81 = arith.constant dense<0.000000e+00> : vector<16xf32>
    %117 = vector.multi_reduction <add>, %116, %cst_81 [1] : vector<16x16xf32> to vector<16xf32>
    %118 = vector.shape_cast %117 : vector<16xf32> to vector<16x1xf32>
    %119 = tpu.reciprocal %118 {approx = true} : vector<16x1xf32> -> vector<16x1xf32>
    %120 = vector.broadcast %119 : vector<16x1xf32> to vector<16x16xf32>
    %121 = arith.mulf %116, %120 : vector<16x16xf32>
    %122 = arith.truncf %121 : vector<16x16xf32> to vector<16x16xbf16>
    %123 = arith.truncf %108 : vector<16x8xf32> to vector<16x8xbf16>
    %cst_82 = arith.constant dense<0.000000e+00> : vector<16x8xf32>
    %124 = tpu.matmul %122, %123, %cst_82 {dimension_numbers = #tpu.dot_dimension_numbers<[1], [0], [0], [1], [0, 0, 1, 1], [], []>} : vector<16x16xbf16>, vector<16x8xbf16>, vector<16x8xf32> -> vector<16x8xf32>
    %125 = arith.truncf %124 : vector<16x8xf32> to vector<16x8xbf16>
    %c2_83 = arith.constant 2 : index
    %c0_84 = arith.constant 0 : index
    %c0_85 = arith.constant 0 : index
    %126 = vector.load %arg8[%c2_83, %c0_84, %c0_85] : memref<4x8x32xbf16, #tpu.memory_space<vmem>>, vector<1x8x32xbf16>
    %127 = vector.shape_cast %126 : vector<1x8x32xbf16> to vector<8x32xbf16>
    %cst_86 = arith.constant dense<0.000000e+00> : vector<16x32xf32>
    %128 = tpu.matmul %125, %127, %cst_86 {dimension_numbers = #tpu.dot_dimension_numbers<[1], [0], [0], [1], [0, 0, 1, 1], [], []>} : vector<16x8xbf16>, vector<8x32xbf16>, vector<16x32xf32> -> vector<16x32xf32>
    %129 = arith.addf %87, %128 : vector<16x32xf32>
    %c3 = arith.constant 3 : index
    %c0_87 = arith.constant 0 : index
    %c0_88 = arith.constant 0 : index
    %130 = vector.load %arg2[%c3, %c0_87, %c0_88] : memref<4x32x8xbf16, #tpu.memory_space<vmem>>, vector<1x32x8xbf16>
    %131 = vector.shape_cast %130 : vector<1x32x8xbf16> to vector<32x8xbf16>
    %cst_89 = arith.constant dense<0.000000e+00> : vector<16x8xf32>
    %132 = tpu.matmul %2, %131, %cst_89 {dimension_numbers = #tpu.dot_dimension_numbers<[1], [0], [0], [1], [0, 0, 1, 1], [], []>} : vector<16x32xbf16>, vector<32x8xbf16>, vector<16x8xf32> -> vector<16x8xf32>
    %c3_90 = arith.constant 3 : index
    %c0_91 = arith.constant 0 : index
    %c0_92 = arith.constant 0 : index
    %133 = vector.load %arg5[%c3_90, %c0_91, %c0_92] : memref<4x1x8xf32, #tpu.memory_space<vmem>>, vector<1x1x8xf32>
    %134 = vector.shape_cast %133 : vector<1x1x8xf32> to vector<1x8xf32>
    %135 = vector.broadcast %134 : vector<1x8xf32> to vector<16x8xf32>
    %136 = arith.addf %132, %135 : vector<16x8xf32>
    %c3_93 = arith.constant 3 : index
    %c0_94 = arith.constant 0 : index
    %c0_95 = arith.constant 0 : index
    %137 = vector.load %arg3[%c3_93, %c0_94, %c0_95] : memref<4x32x8xbf16, #tpu.memory_space<vmem>>, vector<1x32x8xbf16>
    %138 = vector.shape_cast %137 : vector<1x32x8xbf16> to vector<32x8xbf16>
    %cst_96 = arith.constant dense<0.000000e+00> : vector<16x8xf32>
    %139 = tpu.matmul %2, %138, %cst_96 {dimension_numbers = #tpu.dot_dimension_numbers<[1], [0], [0], [1], [0, 0, 1, 1], [], []>} : vector<16x32xbf16>, vector<32x8xbf16>, vector<16x8xf32> -> vector<16x8xf32>
    %c3_97 = arith.constant 3 : index
    %c0_98 = arith.constant 0 : index
    %c0_99 = arith.constant 0 : index
    %140 = vector.load %arg6[%c3_97, %c0_98, %c0_99] : memref<4x1x8xf32, #tpu.memory_space<vmem>>, vector<1x1x8xf32>
    %141 = vector.shape_cast %140 : vector<1x1x8xf32> to vector<1x8xf32>
    %142 = vector.broadcast %141 : vector<1x8xf32> to vector<16x8xf32>
    %143 = arith.addf %139, %142 : vector<16x8xf32>
    %c3_100 = arith.constant 3 : index
    %c0_101 = arith.constant 0 : index
    %c0_102 = arith.constant 0 : index
    %144 = vector.load %arg4[%c3_100, %c0_101, %c0_102] : memref<4x32x8xbf16, #tpu.memory_space<vmem>>, vector<1x32x8xbf16>
    %145 = vector.shape_cast %144 : vector<1x32x8xbf16> to vector<32x8xbf16>
    %cst_103 = arith.constant dense<0.000000e+00> : vector<16x8xf32>
    %146 = tpu.matmul %2, %145, %cst_103 {dimension_numbers = #tpu.dot_dimension_numbers<[1], [0], [0], [1], [0, 0, 1, 1], [], []>} : vector<16x32xbf16>, vector<32x8xbf16>, vector<16x8xf32> -> vector<16x8xf32>
    %c3_104 = arith.constant 3 : index
    %c0_105 = arith.constant 0 : index
    %c0_106 = arith.constant 0 : index
    %147 = vector.load %arg7[%c3_104, %c0_105, %c0_106] : memref<4x1x8xf32, #tpu.memory_space<vmem>>, vector<1x1x8xf32>
    %148 = vector.shape_cast %147 : vector<1x1x8xf32> to vector<1x8xf32>
    %149 = vector.broadcast %148 : vector<1x8xf32> to vector<16x8xf32>
    %150 = arith.addf %146, %149 : vector<16x8xf32>
    %151 = arith.truncf %136 : vector<16x8xf32> to vector<16x8xbf16>
    %152 = arith.truncf %143 : vector<16x8xf32> to vector<16x8xbf16>
    %cst_107 = arith.constant dense<0.000000e+00> : vector<16x16xf32>
    %153 = tpu.matmul %151, %152, %cst_107 {dimension_numbers = #tpu.dot_dimension_numbers<[1], [1], [0], [0], [0, 0, 1, 0], [], []>} : vector<16x8xbf16>, vector<16x8xbf16>, vector<16x16xf32> -> vector<16x16xf32>
    %cst_108 = arith.constant dense<0xFF800000> : vector<16xf32>
    %154 = vector.multi_reduction <maximumf>, %153, %cst_108 [1] : vector<16x16xf32> to vector<16xf32>
    %155 = vector.shape_cast %154 : vector<16xf32> to vector<16x1xf32>
    %156 = vector.broadcast %155 : vector<16x1xf32> to vector<16x16xf32>
    %157 = arith.subf %153, %156 : vector<16x16xf32>
    %158 = math.exp %157 : vector<16x16xf32>
    %cst_109 = arith.constant dense<0.000000e+00> : vector<16xf32>
    %159 = vector.multi_reduction <add>, %158, %cst_109 [1] : vector<16x16xf32> to vector<16xf32>
    %160 = vector.shape_cast %159 : vector<16xf32> to vector<16x1xf32>
    %161 = tpu.reciprocal %160 {approx = true} : vector<16x1xf32> -> vector<16x1xf32>
    %162 = vector.broadcast %161 : vector<16x1xf32> to vector<16x16xf32>
    %163 = arith.mulf %158, %162 : vector<16x16xf32>
    %164 = arith.truncf %163 : vector<16x16xf32> to vector<16x16xbf16>
    %165 = arith.truncf %150 : vector<16x8xf32> to vector<16x8xbf16>
    %cst_110 = arith.constant dense<0.000000e+00> : vector<16x8xf32>
    %166 = tpu.matmul %164, %165, %cst_110 {dimension_numbers = #tpu.dot_dimension_numbers<[1], [0], [0], [1], [0, 0, 1, 1], [], []>} : vector<16x16xbf16>, vector<16x8xbf16>, vector<16x8xf32> -> vector<16x8xf32>
    %167 = arith.truncf %166 : vector<16x8xf32> to vector<16x8xbf16>
    %c3_111 = arith.constant 3 : index
    %c0_112 = arith.constant 0 : index
    %c0_113 = arith.constant 0 : index
    %168 = vector.load %arg8[%c3_111, %c0_112, %c0_113] : memref<4x8x32xbf16, #tpu.memory_space<vmem>>, vector<1x8x32xbf16>
    %169 = vector.shape_cast %168 : vector<1x8x32xbf16> to vector<8x32xbf16>
    %cst_114 = arith.constant dense<0.000000e+00> : vector<16x32xf32>
    %170 = tpu.matmul %167, %169, %cst_114 {dimension_numbers = #tpu.dot_dimension_numbers<[1], [0], [0], [1], [0, 0, 1, 1], [], []>} : vector<16x8xbf16>, vector<8x32xbf16>, vector<16x32xf32> -> vector<16x32xf32>
    %171 = arith.addf %129, %170 : vector<16x32xf32>
    %c0_115 = arith.constant 0 : index
    %c0_116 = arith.constant 0 : index
    %172 = vector.load %arg9[%c0_115, %c0_116] : memref<1x32xf32, #tpu.memory_space<vmem>>, vector<1x32xf32>
    %173 = vector.broadcast %172 : vector<1x32xf32> to vector<16x32xf32>
    %174 = arith.addf %171, %173 : vector<16x32xf32>
    %c0_117 = arith.constant 0 : index
    %c0_118 = arith.constant 0 : index
    %c0_119 = arith.constant 0 : index
    %175 = vector.load %arg10[%c0_117, %c0_118, %c0_119] : memref<1x16x32xf32, #tpu.memory_space<vmem>>, vector<1x16x32xf32>
    %176 = vector.shape_cast %175 : vector<1x16x32xf32> to vector<16x32xf32>
    %177 = vector.shape_cast %174 : vector<16x32xf32> to vector<1x16x32xf32>
    tpu.vector_store %arg10[%c0_117, %c0_118, %c0_119], %177 {strides = array<i32>} : memref<1x16x32xf32, #tpu.memory_space<vmem>>, vector<1x16x32xf32>,
    return
  }
  func.func @transform_0(%arg0: i32) -> (i32, i32, i32) {
    %c0_i32 = arith.constant 0 : i32
    %c0_i32_0 = arith.constant 0 : i32
    %c0_i32_1 = arith.constant 0 : i32
    return %arg0, %c0_i32, %c0_i32_0 : i32, i32, i32
  }
  func.func @transform_1(%arg0: i32) -> (i32, i32, i32) {
    %c0_i32 = arith.constant 0 : i32
    %c0_i32_0 = arith.constant 0 : i32
    %c0_i32_1 = arith.constant 0 : i32
    %c0_i32_2 = arith.constant 0 : i32
    return %c0_i32, %c0_i32_0, %c0_i32_1 : i32, i32, i32
  }
  func.func @transform_2(%arg0: i32) -> (i32, i32, i32) {
    %c0_i32 = arith.constant 0 : i32
    %c0_i32_0 = arith.constant 0 : i32
    %c0_i32_1 = arith.constant 0 : i32
    %c0_i32_2 = arith.constant 0 : i32
    return %c0_i32, %c0_i32_0, %c0_i32_1 : i32, i32, i32
  }
  func.func @transform_3(%arg0: i32) -> (i32, i32, i32) {
    %c0_i32 = arith.constant 0 : i32
    %c0_i32_0 = arith.constant 0 : i32
    %c0_i32_1 = arith.constant 0 : i32
    %c0_i32_2 = arith.constant 0 : i32
    return %c0_i32, %c0_i32_0, %c0_i32_1 : i32, i32, i32
  }
  func.func @transform_4(%arg0: i32) -> (i32, i32, i32) {
    %c0_i32 = arith.constant 0 : i32
    %c0_i32_0 = arith.constant 0 : i32
    %c0_i32_1 = arith.constant 0 : i32
    %c0_i32_2 = arith.constant 0 : i32
    return %c0_i32, %c0_i32_0, %c0_i32_1 : i32, i32, i32
  }
  func.func @transform_5(%arg0: i32) -> (i32, i32, i32) {
    %c0_i32 = arith.constant 0 : i32
    %c0_i32_0 = arith.constant 0 : i32
    %c0_i32_1 = arith.constant 0 : i32
    %c0_i32_2 = arith.constant 0 : i32
    return %c0_i32, %c0_i32_0, %c0_i32_1 : i32, i32, i32
  }
  func.func @transform_6(%arg0: i32) -> (i32, i32, i32) {
    %c0_i32 = arith.constant 0 : i32
    %c0_i32_0 = arith.constant 0 : i32
    %c0_i32_1 = arith.constant 0 : i32
    %c0_i32_2 = arith.constant 0 : i32
    return %c0_i32, %c0_i32_0, %c0_i32_1 : i32, i32, i32
  }
  func.func @transform_7(%arg0: i32) -> (i32, i32, i32) {
    %c0_i32 = arith.constant 0 : i32
    %c0_i32_0 = arith.constant 0 : i32
    %c0_i32_1 = arith.constant 0 : i32
    %c0_i32_2 = arith.constant 0 : i32
    return %c0_i32, %c0_i32_0, %c0_i32_1 : i32, i32, i32
  }
  func.func @transform_8(%arg0: i32) -> (i32, i32) {
    %c0_i32 = arith.constant 0 : i32
    %c0_i32_0 = arith.constant 0 : i32
    %c0_i32_1 = arith.constant 0 : i32
    return %c0_i32, %c0_i32_0 : i32, i32
  }
  func.func @transform_9(%arg0: i32) -> (i32, i32, i32) {
    %c0_i32 = arith.constant 0 : i32
    %c0_i32_0 = arith.constant 0 : i32
    %c0_i32_1 = arith.constant 0 : i32
    return %arg0, %c0_i32, %c0_i32_0 : i32, i32, i32
  }
}

</mosaic_0001>

<llo_original>
// kernel: tpu_custom_call.1
$region0: #{tpu_custom_call.1}
  #allocation0 [shape = 'u32[]', space=smem, size = 0x4, offset = 0x4, fixed_abs, tag = 'smem constant byte address 0x4 - core index']
  #allocation1 [shape = 'u32[144,128]{1,0:T(1,128)}', space=vmem, size = 0x12000, scoped, tag = 'internal scratch']
  %s0 = inlined_call_operand.vmem [shape: f32[2,16,32], index: 0, kind: input, shape index: {}]
  %s1 = inlined_call_operand.vmem [shape: bf16[4,32,8], index: 1, kind: input, shape index: {}]
  %s2 = inlined_call_operand.vmem [shape: bf16[4,32,8], index: 2, kind: input, shape index: {}]
  %s3 = inlined_call_operand.vmem [shape: bf16[4,32,8], index: 3, kind: input, shape index: {}]
  %s4 = inlined_call_operand.vmem [shape: f32[4,1,8], index: 4, kind: input, shape index: {}]
  %s5 = inlined_call_operand.vmem [shape: f32[4,1,8], index: 5, kind: input, shape index: {}]
  %s6 = inlined_call_operand.vmem [shape: f32[4,1,8], index: 6, kind: input, shape index: {}]
  %s7 = inlined_call_operand.vmem [shape: bf16[4,8,32], index: 7, kind: input, shape index: {}]
  %s8 = inlined_call_operand.vmem [shape: f32[1,32], index: 8, kind: input, shape index: {}]
  %s9 = inlined_call_operand.hbm [shape: f32[2,16,32], index: 9, kind: output, shape index: {}]
  %s10 = sld [smem:[#allocation0]]
  $region69: #{tpu_custom_call.1} parent=0
    _
  %s12 = ssub.s32 1, %s10
  %s13 = scalar_select 0, %s12, %s10
  $region1: #{tpu_custom_call.1} parent=0
    #allocation2 [shape = 'u8[16384]{0}', space=vmem, size = 0x4000, scoped, tag = 'output window, operand 0']
    #allocation3 [shape = 's32[2]{0}', space=sflag, size = 0x8, scoped, tag = 'scoped memory for tpu_custom_call.1']
    %14 = vsyncpa [#allocation3], 0
    %s15 = scalar_lea.sflag [#allocation3], 1
    %16 = vsyncpa %s15, 0
    loop: start=0, step=1, limit=4
    $region2: #{tpu_custom_call.1} parent=1 // loop_pre_header
      _
    $region3: #{tpu_custom_call.1} parent=1 // loop_header
      %s18 = sphi 0, %s22
      %p19 = scmp.ge.s32.totalorder %s18, 4
      %s28 = sphi 0, %s30
      %s31 = sphi 0, %s28
      %s32 = sphi 0, %s31
      %s48 = sphi 0, %s32
      %s52 = sphi 0, %s52
      %s54 = sphi 0, %s52
      %s55 = sphi 0, %s54
      %s69 = sphi 0, %s55
      %s73 = sphi 0, %s73
      %s75 = sphi 0, %s73
      %s76 = sphi 0, %s75
      %s90 = sphi 0, %s76
      %s94 = sphi 0, %s94
      %s96 = sphi 0, %s94
      %s97 = sphi 0, %s96
      %s111 = sphi 0, %s97
      %s115 = sphi 0, %s115
      %s117 = sphi 0, %s115
      %s118 = sphi 0, %s117
      %s132 = sphi 0, %s118
      %s136 = sphi 0, %s136
      %s138 = sphi 0, %s136
      %s139 = sphi 0, %s138
      %s153 = sphi 0, %s139
      %s157 = sphi 0, %s157
      %s159 = sphi 0, %s157
      %s160 = sphi 0, %s159
      %s174 = sphi 0, %s160
      %s178 = sphi 0, %s178
      %s180 = sphi 0, %s178
      %s181 = sphi 0, %s180
      %s195 = sphi 0, %s181
      %s199 = sphi 0, %s199
      %s201 = sphi 0, %s199
      %s202 = sphi 0, %s201
      %s216 = sphi 0, %s202
      %s222 = sphi 0, %s224
      %s225 = sphi 0, %s222
      %s226 = sphi 0, %s225
      %s242 = sphi 0, %s226
    $region4: #{tpu_custom_call.1} parent=1 // loop_header_branch
      %21 = sbr.rel (%p19) target = $region8
    $region5: #{tpu_custom_call.1} parent=1 // loop_body
      %s23 = ssub.s32 %s18, 1
      %s24 = ssub.s32 %s18, 2
      %s25 = sadd.s32 %s18, 1
      %s26 = ssub.s32 %s18, %s25
      %p27 = scmp.eq.s32.totalorder %s26, 0
      %s29 = sadd.s32 %s28, 1
      %s30 = scalar_select %p27, %s28, %s29
      %p33 = pneg %p27
      %p34 = scmp.eq.s32.totalorder %s18, 1
      %p35 = por %p33, %p34
      %p36 = scmp.ne.s32.totalorder %s28, %s31
      %p37 = scmp.eq.s32.totalorder %s18, 0
      %p38 = por %p36, %p37
      %p39 = scmp.ne.s32.totalorder %s28, %s31
      %p40 = scmp.eq.s32.totalorder %s23, 1
      %p41 = por %p39, %p40
      %p42 = scmp.ne.s32.totalorder %s31, %s32
      %p43 = scmp.eq.s32.totalorder %s23, 0
      %p44 = por %p42, %p43
      %p45 = scmp.ne.s32.totalorder %s31, %s32
      %p46 = scmp.eq.s32.totalorder %s24, 1
      %p47 = por %p45, %p46
      %p49 = scmp.ne.s32.totalorder %s32, %s48
      %p50 = scmp.eq.s32.totalorder %s24, 0
      %p51 = por %p49, %p50
      %s53 = sadd.s32 %s52, 1
      %p56 = scmp.eq.s32.totalorder %s18, 1
      %p57 = scmp.ne.s32.totalorder %s52, %s54
      %p58 = scmp.eq.s32.totalorder %s18, 0
      %p59 = por %p57, %p58
      %p60 = scmp.ne.s32.totalorder %s52, %s54
      %p61 = scmp.eq.s32.totalorder %s23, 1
      %p62 = por %p60, %p61
      %p63 = scmp.ne.s32.totalorder %s54, %s55
      %p64 = scmp.eq.s32.totalorder %s23, 0
      %p65 = por %p63, %p64
      %p66 = scmp.ne.s32.totalorder %s54, %s55
      %p67 = scmp.eq.s32.totalorder %s24, 1
      %p68 = por %p66, %p67
      %p70 = scmp.ne.s32.totalorder %s55, %s69
      %p71 = scmp.eq.s32.totalorder %s24, 0
      %p72 = por %p70, %p71
      %s74 = sadd.s32 %s73, 1
      %p77 = scmp.eq.s32.totalorder %s18, 1
      %p78 = scmp.ne.s32.totalorder %s73, %s75
      %p79 = scmp.eq.s32.totalorder %s18, 0
      %p80 = por %p78, %p79
      %p81 = scmp.ne.s32.totalorder %s73, %s75
      %p82 = scmp.eq.s32.totalorder %s23, 1
      %p83 = por %p81, %p82
      %p84 = scmp.ne.s32.totalorder %s75, %s76
      %p85 = scmp.eq.s32.totalorder %s23, 0
      %p86 = por %p84, %p85
      %p87 = scmp.ne.s32.totalorder %s75, %s76
      %p88 = scmp.eq.s32.totalorder %s24, 1
      %p89 = por %p87, %p88
      %p91 = scmp.ne.s32.totalorder %s76, %s90
      %p92 = scmp.eq.s32.totalorder %s24, 0
      %p93 = por %p91, %p92
      %s95 = sadd.s32 %s94, 1
      %p98 = scmp.eq.s32.totalorder %s18, 1
      %p99 = scmp.ne.s32.totalorder %s94, %s96
      %p100 = scmp.eq.s32.totalorder %s18, 0
      %p101 = por %p99, %p100
      %p102 = scmp.ne.s32.totalorder %s94, %s96
      %p103 = scmp.eq.s32.totalorder %s23, 1
      %p104 = por %p102, %p103
      %p105 = scmp.ne.s32.totalorder %s96, %s97
      %p106 = scmp.eq.s32.totalorder %s23, 0
      %p107 = por %p105, %p106
      %p108 = scmp.ne.s32.totalorder %s96, %s97
      %p109 = scmp.eq.s32.totalorder %s24, 1
      %p110 = por %p108, %p109
      %p112 = scmp.ne.s32.totalorder %s97, %s111
      %p113 = scmp.eq.s32.totalorder %s24, 0
      %p114 = por %p112, %p113
      %s116 = sadd.s32 %s115, 1
      %p119 = scmp.eq.s32.totalorder %s18, 1
      %p120 = scmp.ne.s32.totalorder %s115, %s117
      %p121 = scmp.eq.s32.totalorder %s18, 0
      %p122 = por %p120, %p121
      %p123 = scmp.ne.s32.totalorder %s115, %s117
      %p124 = scmp.eq.s32.totalorder %s23, 1
      %p125 = por %p123, %p124
      %p126 = scmp.ne.s32.totalorder %s117, %s118
      %p127 = scmp.eq.s32.totalorder %s23, 0
      %p128 = por %p126, %p127
      %p129 = scmp.ne.s32.totalorder %s117, %s118
      %p130 = scmp.eq.s32.totalorder %s24, 1
      %p131 = por %p129, %p130
      %p133 = scmp.ne.s32.totalorder %s118, %s132
      %p134 = scmp.eq.s32.totalorder %s24, 0
      %p135 = por %p133, %p134
      %s137 = sadd.s32 %s136, 1
      %p140 = scmp.eq.s32.totalorder %s18, 1
      %p141 = scmp.ne.s32.totalorder %s136, %s138
      %p142 = scmp.eq.s32.totalorder %s18, 0
      %p143 = por %p141, %p142
      %p144 = scmp.ne.s32.totalorder %s136, %s138
      %p145 = scmp.eq.s32.totalorder %s23, 1
      %p146 = por %p144, %p145
      %p147 = scmp.ne.s32.totalorder %s138, %s139
      %p148 = scmp.eq.s32.totalorder %s23, 0
      %p149 = por %p147, %p148
      %p150 = scmp.ne.s32.totalorder %s138, %s139
      %p151 = scmp.eq.s32.totalorder %s24, 1
      %p152 = por %p150, %p151
      %p154 = scmp.ne.s32.totalorder %s139, %s153
      %p155 = scmp.eq.s32.totalorder %s24, 0
      %p156 = por %p154, %p155
      %s158 = sadd.s32 %s157, 1
      %p161 = scmp.eq.s32.totalorder %s18, 1
      %p162 = scmp.ne.s32.totalorder %s157, %s159
      %p163 = scmp.eq.s32.totalorder %s18, 0
      %p164 = por %p162, %p163
      %p165 = scmp.ne.s32.totalorder %s157, %s159
      %p166 = scmp.eq.s32.totalorder %s23, 1
      %p167 = por %p165, %p166
      %p168 = scmp.ne.s32.totalorder %s159, %s160
      %p169 = scmp.eq.s32.totalorder %s23, 0
      %p170 = por %p168, %p169
      %p171 = scmp.ne.s32.totalorder %s159, %s160
      %p172 = scmp.eq.s32.totalorder %s24, 1
      %p173 = por %p171, %p172
      %p175 = scmp.ne.s32.totalorder %s160, %s174
      %p176 = scmp.eq.s32.totalorder %s24, 0
      %p177 = por %p175, %p176
      %s179 = sadd.s32 %s178, 1
      %p182 = scmp.eq.s32.totalorder %s18, 1
      %p183 = scmp.ne.s32.totalorder %s178, %s180
      %p184 = scmp.eq.s32.totalorder %s18, 0
      %p185 = por %p183, %p184
      %p186 = scmp.ne.s32.totalorder %s178, %s180
      %p187 = scmp.eq.s32.totalorder %s23, 1
      %p188 = por %p186, %p187
      %p189 = scmp.ne.s32.totalorder %s180, %s181
      %p190 = scmp.eq.s32.totalorder %s23, 0
      %p191 = por %p189, %p190
      %p192 = scmp.ne.s32.totalorder %s180, %s181
      %p193 = scmp.eq.s32.totalorder %s24, 1
      %p194 = por %p192, %p193
      %p196 = scmp.ne.s32.totalorder %s181, %s195
      %p197 = scmp.eq.s32.totalorder %s24, 0
      %p198 = por %p196, %p197
      %s200 = sadd.s32 %s199, 1
      %p203 = scmp.eq.s32.totalorder %s18, 1
      %p204 = scmp.ne.s32.totalorder %s199, %s201
      %p205 = scmp.eq.s32.totalorder %s18, 0
      %p206 = por %p204, %p205
      %p207 = scmp.ne.s32.totalorder %s199, %s201
      %p208 = scmp.eq.s32.totalorder %s23, 1
      %p209 = por %p207, %p208
      %p210 = scmp.ne.s32.totalorder %s201, %s202
      %p211 = scmp.eq.s32.totalorder %s23, 0
      %p212 = por %p210, %p211
      %p213 = scmp.ne.s32.totalorder %s201, %s202
      %p214 = scmp.eq.s32.totalorder %s24, 1
      %p215 = por %p213, %p214
      %p217 = scmp.ne.s32.totalorder %s202, %s216
      %p218 = scmp.eq.s32.totalorder %s24, 0
      %p219 = por %p217, %p218
      %s220 = ssub.s32 %s18, %s25
      %p221 = scmp.eq.s32.totalorder %s220, 0
      %s223 = sadd.s32 %s222, 1
      %s224 = scalar_select %p221, %s222, %s223
      %p227 = pneg %p221
      %p228 = scmp.eq.s32.totalorder %s18, 1
      %p229 = por %p227, %p228
      %p230 = scmp.ne.s32.totalorder %s222, %s225
      %p231 = scmp.eq.s32.totalorder %s18, 0
      %p232 = por %p230, %p231
      %p233 = scmp.ne.s32.totalorder %s222, %s225
      %p234 = scmp.eq.s32.totalorder %s23, 1
      %p235 = por %p233, %p234
      %p236 = scmp.ne.s32.totalorder %s225, %s226
      %p237 = scmp.eq.s32.totalorder %s23, 0
      %p238 = por %p236, %p237
      %p239 = scmp.ne.s32.totalorder %s225, %s226
      %p240 = scmp.eq.s32.totalorder %s24, 1
      %p241 = por %p239, %p240
      %p243 = scmp.ne.s32.totalorder %s226, %s242
      %p244 = scmp.eq.s32.totalorder %s24, 0
      %p245 = por %p243, %p244
      %p246 = scmp.le.s32.totalorder 1, %s18
      %p247 = scmp.lt.s32.totalorder %s18, 3
      %p248 = pnand %p246, %p247
      %p249 = pneg %p248
      // Predicated region
      $region9: #{tpu_custom_call.1} parent=5 // pred_check
        _
      $region10: #{tpu_custom_call.1} parent=5 // pred_check_branch
        %251 = sbr.rel (%p248) target = $region12
      $region11: #{tpu_custom_call.1} parent=5 // pred_region
        %s252 = ssub.s32 %s18, 1
        // Predicated region
        $region13: #{tpu_custom_call.1} parent=11 // pred_check
          %p253 = pneg %p65
        $region14: #{tpu_custom_call.1} parent=11 // pred_check_branch
          %255 = sbr.rel (%p253) target = $region16
        $region15: #{tpu_custom_call.1} parent=11 // pred_region
          _
        $region16: #{tpu_custom_call.1} parent=11 // pred_fallthru
          _
        // Predicated region
        $region17: #{tpu_custom_call.1} parent=11 // pred_check
          %p256 = pneg %p86
        $region18: #{tpu_custom_call.1} parent=11 // pred_check_branch
          %258 = sbr.rel (%p256) target = $region20
        $region19: #{tpu_custom_call.1} parent=11 // pred_region
          _
        $region20: #{tpu_custom_call.1} parent=11 // pred_fallthru
          _
        // Predicated region
        $region21: #{tpu_custom_call.1} parent=11 // pred_check
          %p259 = pneg %p107
        $region22: #{tpu_custom_call.1} parent=11 // pred_check_branch
          %261 = sbr.rel (%p259) target = $region24
        $region23: #{tpu_custom_call.1} parent=11 // pred_region
          _
        $region24: #{tpu_custom_call.1} parent=11 // pred_fallthru
          _
        // Predicated region
        $region25: #{tpu_custom_call.1} parent=11 // pred_check
          %p262 = pneg %p128
        $region26: #{tpu_custom_call.1} parent=11 // pred_check_branch
          %264 = sbr.rel (%p262) target = $region28
        $region27: #{tpu_custom_call.1} parent=11 // pred_region
          _
        $region28: #{tpu_custom_call.1} parent=11 // pred_fallthru
          _
        // Predicated region
        $region29: #{tpu_custom_call.1} parent=11 // pred_check
          %p265 = pneg %p149
        $region30: #{tpu_custom_call.1} parent=11 // pred_check_branch
          %267 = sbr.rel (%p265) target = $region32
        $region31: #{tpu_custom_call.1} parent=11 // pred_region
          _
        $region32: #{tpu_custom_call.1} parent=11 // pred_fallthru
          _
        // Predicated region
        $region33: #{tpu_custom_call.1} parent=11 // pred_check
          %p268 = pneg %p170
        $region34: #{tpu_custom_call.1} parent=11 // pred_check_branch
          %270 = sbr.rel (%p268) target = $region36
        $region35: #{tpu_custom_call.1} parent=11 // pred_region
          _
        $region36: #{tpu_custom_call.1} parent=11 // pred_fallthru
          _
        // Predicated region
        $region37: #{tpu_custom_call.1} parent=11 // pred_check
          %p271 = pneg %p191
        $region38: #{tpu_custom_call.1} parent=11 // pred_check_branch
          %273 = sbr.rel (%p271) target = $region40
        $region39: #{tpu_custom_call.1} parent=11 // pred_region
          _
        $region40: #{tpu_custom_call.1} parent=11 // pred_fallthru
          _
        // Predicated region
        $region41: #{tpu_custom_call.1} parent=11 // pred_check
          %p274 = pneg %p212
        $region42: #{tpu_custom_call.1} parent=11 // pred_check_branch
          %276 = sbr.rel (%p274) target = $region44
        $region43: #{tpu_custom_call.1} parent=11 // pred_region
          _
        $region44: #{tpu_custom_call.1} parent=11 // pred_fallthru
          _
      $region12: #{tpu_custom_call.1} parent=5 // pred_fallthru
        _
      %p277 = scmp.lt.s32.totalorder %s18, 2
      // Predicated region
      $region45: #{tpu_custom_call.1} parent=5 // pred_check
        %p278 = pneg %p277
      $region46: #{tpu_custom_call.1} parent=5 // pred_check_branch
        %280 = sbr.rel (%p278) target = $region48
      $region47: #{tpu_custom_call.1} parent=5 // pred_region
        // Predicated region
        $region49: #{tpu_custom_call.1} parent=47 // pred_check
          %p281 = pneg %p38
        $region50: #{tpu_custom_call.1} parent=47 // pred_check_branch
          %283 = sbr.rel (%p281) target = $region52
        $region51: #{tpu_custom_call.1} parent=47 // pred_region
          %p284 = scmp.lt.s32.totalorder %s18, 1
          %s285 = scalar_select %p284, %s18, 1
          %s286 = smul.addr %s285, 2
          %s287 = smul.addr %s286, 8
          %s288 = scalar_lea.vmem %s0, %s287
        $region52: #{tpu_custom_call.1} parent=47 // pred_fallthru
          _
      $region48: #{tpu_custom_call.1} parent=5 // pred_fallthru
        _
      %p289 = scmp.le.s32.totalorder 1, %s18
      %p290 = scmp.lt.s32.totalorder %s18, 3
      %p291 = pnand %p289, %p290
      %p292 = pneg %p291
      // Predicated region
      $region53: #{tpu_custom_call.1} parent=5 // pred_check
        _
      $region54: #{tpu_custom_call.1} parent=5 // pred_check_branch
        %294 = sbr.rel (%p291) target = $region56
      $region55: #{tpu_custom_call.1} parent=5 // pred_region
        %s295 = ssub.s32 %s18, 1
        %p296 = scmp.lt.s32.totalorder %s23, 1
        %s297 = scalar_select %p296, %s23, 1
        %s298 = smul.addr %s297, 2
        %s299 = smul.addr %s298, 8
        %s300 = scalar_lea.vmem %s0, %s299
        %p301 = pneg %p44
        %p302 = pneg %p41
        %p303 = pneg %p65
        %p304 = pneg %p62
        %p305 = pneg %p86
        %p306 = pneg %p83
        %p307 = pneg %p107
        %p308 = pneg %p104
        %p309 = pneg %p128
        %p310 = pneg %p125
        %p311 = pneg %p149
        %p312 = pneg %p146
        %p313 = pneg %p170
        %p314 = pneg %p167
        %p315 = pneg %p191
        %p316 = pneg %p188
        %p317 = pneg %p212
        %p318 = pneg %p209
        %p319 = pneg %p238
        %p320 = pneg %p235
        %s321 = sand.u32 %s225, 1
        %s322 = scalar_lea.sflag [#allocation3], %s321
        %s323 = sand.u32 %s225, 1
        %s324 = smul.addr %s323, 16
        %s325 = scalar_lea.vmem [#allocation2], %s324
        %p326 = scmp.lt.s32.totalorder %s23, 1
        %s327 = scalar_select %p326, %s23, 1
        %s328 = smul.addr %s327, 2
        %s329 = smul.addr %s328, 8
        %s330 = scalar_lea.vmem %s0, %s329
        %v332 = vld [vmem:[%s330] sm:$0xff]
        %v333 = vld [vmem:[%s330 + $0x8] sm:$0xff]
        %v334 = vpack.c.bf16 %v333, %v332
        %v335 = vld [vmem:[%s1] sm:$0xf]
        %v336 = vld [vmem:[%s1 + $0x4] sm:$0xf]
        %v337 = vld [vmem:[%s1 + $0x8] sm:$0xf]
        %v338 = vld [vmem:[%s1 + $0xc] sm:$0xf]
        %v339 = vld [vmem:[%s4] sm:$0x1]
        %v341 = vlaneseq
        %v342 = vshrl.u32 %v341, 7
        %v343 = vsub.s32 0, %v342
        %v344 = vrot.slane %v339, %v343
        %v350 = vunpack.c.l.b16 %v335
        %v351 = vunpack.c.l.b16 %v336
        %v352 = vunpack.c.l.b16 %v337
        %v353 = vunpack.c.l.b16 %v338
        %v354 = vpack.c.b16 %v351, %v350
        %v355 = vpack.c.b16 %v353, %v352
        %vm358 = vcmask 261120
        %v360 = vsel %vm358, %v334, 0
        %362 = vmatprep.subr.bf16.mxu0 0
        %363 = vmatpush1.bf16.msra.mxu0 0
        %364 = vmatprep.subr.bf16.mxu0 0
        %365 = vmatpush1.bf16.msra.mxu0 0
        %366 = vmatprep.subr.bf16.mxu0 0
        %367 = vmatpush1.bf16.msra.mxu0 0
        %368 = vmatprep.subr.bf16.mxu0 0
        %369 = vmatpush1.bf16.msra.mxu0 0
        %370 = vmatprep.subr.bf16.mxu0 0
        %371 = vmatpush1.bf16.msra.mxu0 0
        %372 = vmatprep.subr.bf16.mxu0 0
        %373 = vmatpush1.bf16.msra.mxu0 0
        %374 = vmatprep.subr.bf16.mxu0 0
        %375 = vmatpush1.bf16.msra.mxu0 %v355
        %376 = vmatprep.subr.bf16.mxu0 0
        %377 = vmatpush1.bf16.msra.mxu0 %v354
        %378 = vmatprep.subr.bf16.mxu0 0
        %379 = vmatpush2.bf16.msra.mxu0 0
        %380 = vmatprep.subr.bf16.mxu0 0
        %381 = vmatpush2.bf16.msra.mxu0 0
        %382 = vmatprep.subr.bf16.mxu0 0
        %383 = vmatpush2.bf16.msra.mxu0 0
        %384 = vmatprep.subr.bf16.mxu0 0
        %385 = vmatpush2.bf16.msra.mxu0 0
        %386 = vmatprep.subr.bf16.mxu0 0
        %387 = vmatpush2.bf16.msra.mxu0 0
        %388 = vmatprep.subr.bf16.mxu0 0
        %389 = vmatpush2.bf16.msra.mxu0 0
        %390 = vmatprep.subr.bf16.mxu0 0
        %391 = vmatpush2.bf16.msra.mxu0 0
        %392 = vmatprep.subr.bf16.mxu0 0
        %393 = vmatpush2.bf16.msra.mxu0 0
        %394 = vmatprep.mubr.bf16.mxu0 0
        %395 = vmatmul.mubr.bf16.gmra.mxu0 %v360
        %v396 = vpop.f32.mrf.mxu0
        %v397 = vadd.f32 %v344, %v396
        %v398 = vpop.f32.mrf.mxu0
        %v399 = vpop.f32.mrf.mxu0
        %v400 = vadd.f32 %v344, %v399
        %v401 = vpop.f32.mrf.mxu0
        %402 = vdwg.mxu0
        %v403 = vld [vmem:[%s2] sm:$0xf]
        %v404 = vld [vmem:[%s2 + $0x4] sm:$0xf]
        %v405 = vld [vmem:[%s2 + $0x8] sm:$0xf]
        %v406 = vld [vmem:[%s2 + $0xc] sm:$0xf]
        %v407 = vld [vmem:[%s5] sm:$0x1]
        %v409 = vlaneseq
        %v410 = vshrl.u32 %v409, 7
        %v411 = vsub.s32 0, %v410
        %v412 = vrot.slane %v407, %v411
        %v418 = vunpack.c.l.b16 %v403
        %v419 = vunpack.c.l.b16 %v404
        %v420 = vunpack.c.l.b16 %v405
        %v421 = vunpack.c.l.b16 %v406
        %v422 = vpack.c.b16 %v419, %v418
        %v423 = vpack.c.b16 %v421, %v420
        %426 = vmatprep.subr.bf16.mxu0 0
        %427 = vmatpush1.bf16.msra.mxu0 0
        %428 = vmatprep.subr.bf16.mxu0 0
        %429 = vmatpush1.bf16.msra.mxu0 0
        %430 = vmatprep.subr.bf16.mxu0 0
        %431 = vmatpush1.bf16.msra.mxu0 0
        %432 = vmatprep.subr.bf16.mxu0 0
        %433 = vmatpush1.bf16.msra.mxu0 0
        %434 = vmatprep.subr.bf16.mxu0 0
        %435 = vmatpush1.bf16.msra.mxu0 0
        %436 = vmatprep.subr.bf16.mxu0 0
        %437 = vmatpush1.bf16.msra.mxu0 0
        %438 = vmatprep.subr.bf16.mxu0 0
        %439 = vmatpush1.bf16.msra.mxu0 %v423
        %440 = vmatprep.subr.bf16.mxu0 0
        %441 = vmatpush1.bf16.msra.mxu0 %v422
        %442 = vmatprep.subr.bf16.mxu0 0
        %443 = vmatpush2.bf16.msra.mxu0 0
        %444 = vmatprep.subr.bf16.mxu0 0
        %445 = vmatpush2.bf16.msra.mxu0 0
        %446 = vmatprep.subr.bf16.mxu0 0
        %447 = vmatpush2.bf16.msra.mxu0 0
        %448 = vmatprep.subr.bf16.mxu0 0
        %449 = vmatpush2.bf16.msra.mxu0 0
        %450 = vmatprep.subr.bf16.mxu0 0
        %451 = vmatpush2.bf16.msra.mxu0 0
        %452 = vmatprep.subr.bf16.mxu0 0
        %453 = vmatpush2.bf16.msra.mxu0 0
        %454 = vmatprep.subr.bf16.mxu0 0
        %455 = vmatpush2.bf16.msra.mxu0 0
        %456 = vmatprep.subr.bf16.mxu0 0
        %457 = vmatpush2.bf16.msra.mxu0 0
        %458 = vmatprep.mubr.bf16.mxu0 0
        %459 = vmatmul.mubr.bf16.gmra.mxu0 %v360
        %v460 = vpop.f32.mrf.mxu0
        %v461 = vadd.f32 %v412, %v460
        %v462 = vpop.f32.mrf.mxu0
        %v463 = vpop.f32.mrf.mxu0
        %v464 = vadd.f32 %v412, %v463
        %v465 = vpop.f32.mrf.mxu0
        %466 = vdwg.mxu0
        %v467 = vld [vmem:[%s3] sm:$0xf]
        %v468 = vld [vmem:[%s3 + $0x4] sm:$0xf]
        %v469 = vld [vmem:[%s3 + $0x8] sm:$0xf]
        %v470 = vld [vmem:[%s3 + $0xc] sm:$0xf]
        %v471 = vld [vmem:[%s6] sm:$0x1]
        %v473 = vlaneseq
        %v474 = vshrl.u32 %v473, 7
        %v475 = vsub.s32 0, %v474
        %v476 = vrot.slane %v471, %v475
        %v482 = vunpack.c.l.b16 %v467
        %v483 = vunpack.c.l.b16 %v468
        %v484 = vunpack.c.l.b16 %v469
        %v485 = vunpack.c.l.b16 %v470
        %v486 = vpack.c.b16 %v483, %v482
        %v487 = vpack.c.b16 %v485, %v484
        %490 = vmatprep.subr.bf16.mxu0 0
        %491 = vmatpush1.bf16.msra.mxu0 0
        %492 = vmatprep.subr.bf16.mxu0 0
        %493 = vmatpush1.bf16.msra.mxu0 0
        %494 = vmatprep.subr.bf16.mxu0 0
        %495 = vmatpush1.bf16.msra.mxu0 0
        %496 = vmatprep.subr.bf16.mxu0 0
        %497 = vmatpush1.bf16.msra.mxu0 0
        %498 = vmatprep.subr.bf16.mxu0 0
        %499 = vmatpush1.bf16.msra.mxu0 0
        %500 = vmatprep.subr.bf16.mxu0 0
        %501 = vmatpush1.bf16.msra.mxu0 0
        %502 = vmatprep.subr.bf16.mxu0 0
        %503 = vmatpush1.bf16.msra.mxu0 %v487
        %504 = vmatprep.subr.bf16.mxu0 0
        %505 = vmatpush1.bf16.msra.mxu0 %v486
        %506 = vmatprep.subr.bf16.mxu0 0
        %507 = vmatpush2.bf16.msra.mxu0 0
        %508 = vmatprep.subr.bf16.mxu0 0
        %509 = vmatpush2.bf16.msra.mxu0 0
        %510 = vmatprep.subr.bf16.mxu0 0
        %511 = vmatpush2.bf16.msra.mxu0 0
        %512 = vmatprep.subr.bf16.mxu0 0
        %513 = vmatpush2.bf16.msra.mxu0 0
        %514 = vmatprep.subr.bf16.mxu0 0
        %515 = vmatpush2.bf16.msra.mxu0 0
        %516 = vmatprep.subr.bf16.mxu0 0
        %517 = vmatpush2.bf16.msra.mxu0 0
        %518 = vmatprep.subr.bf16.mxu0 0
        %519 = vmatpush2.bf16.msra.mxu0 0
        %520 = vmatprep.subr.bf16.mxu0 0
        %521 = vmatpush2.bf16.msra.mxu0 0
        %522 = vmatprep.mubr.bf16.mxu0 0
        %523 = vmatmul.mubr.bf16.gmra.mxu0 %v360
        %v524 = vpop.f32.mrf.mxu0
        %v525 = vadd.f32 %v476, %v524
        %v526 = vpop.f32.mrf.mxu0
        %v527 = vpop.f32.mrf.mxu0
        %v528 = vadd.f32 %v476, %v527
        %v529 = vpop.f32.mrf.mxu0
        %530 = vdwg.mxu0
        %v531 = vpack.c.bf16 %v400, %v397
        %v532 = vpack.c.bf16 %v464, %v461
        %vm533 = vcmask 64512
        %v535 = vsel %vm533, %v531, 0
        %v538 = vsel %vm533, %v532, 0
        %540 = vmatprep.subr.bf16.mxu0 0
        %541 = vmatpush1.bf16.xpose.msra.mxu0 0
        %542 = vmatprep.subr.bf16.mxu0 0
        %543 = vmatpush1.bf16.xpose.msra.mxu0 0
        %544 = vmatprep.subr.bf16.mxu0 0
        %545 = vmatpush1.bf16.xpose.msra.mxu0 0
        %546 = vmatprep.subr.bf16.mxu0 0
        %547 = vmatpush1.bf16.xpose.msra.mxu0 0
        %548 = vmatprep.subr.bf16.mxu0 0
        %549 = vmatpush1.bf16.xpose.msra.mxu0 0
        %550 = vmatprep.subr.bf16.mxu0 0
        %551 = vmatpush1.bf16.xpose.msra.mxu0 0
        %552 = vmatprep.subr.bf16.mxu0 0
        %553 = vmatpush1.bf16.xpose.msra.mxu0 0
        %554 = vmatprep.subr.bf16.mxu0 0
        %555 = vmatpush1.bf16.xpose.msra.mxu0 %v538
        %556 = vmatprep.subr.bf16.mxu0 0
        %557 = vmatpush2.bf16.xpose.msra.mxu0 0
        %558 = vmatprep.subr.bf16.mxu0 0
        %559 = vmatpush2.bf16.xpose.msra.mxu0 0
        %560 = vmatprep.subr.bf16.mxu0 0
        %561 = vmatpush2.bf16.xpose.msra.mxu0 0
        %562 = vmatprep.subr.bf16.mxu0 0
        %563 = vmatpush2.bf16.xpose.msra.mxu0 0
        %564 = vmatprep.subr.bf16.mxu0 0
        %565 = vmatpush2.bf16.xpose.msra.mxu0 0
        %566 = vmatprep.subr.bf16.mxu0 0
        %567 = vmatpush2.bf16.xpose.msra.mxu0 0
        %568 = vmatprep.subr.bf16.mxu0 0
        %569 = vmatpush2.bf16.xpose.msra.mxu0 0
        %570 = vmatprep.subr.bf16.mxu0 0
        %571 = vmatpush2.bf16.xpose.msra.mxu0 0
        %572 = vmatprep.mubr.bf16.mxu0 0
        %573 = vmatmul.mubr.bf16.gmra.mxu0 %v535
        %v574 = vpop.f32.mrf.mxu0
        %v575 = vadd.f32 0.0, %v574
        %v576 = vpop.f32.mrf.mxu0
        %v577 = vpop.f32.mrf.mxu0
        %v578 = vadd.f32 0.0, %v577
        %v579 = vpop.f32.mrf.mxu0
        %580 = vdwg.mxu0
        %vm581 = vcmask 130048
        %v582 = vsel %vm581, %v575, -inf
        %583 = vmax.xlane.f32.xlu0 %v582
        %v584 = vpop.xlane.xlu0 %583
        %v585 = vsel %vm581, %v578, -inf
        %586 = vmax.xlane.f32.xlu0 %v585
        %v587 = vpop.xlane.xlu0 %586
        %v588 = vsub.f32 %v575, %v584
        %v589 = vsub.f32 %v578, %v587
        %v590 = vmul.f32 %v588, 1.442695
        %v591 = vpow.pop %v590
        %v592 = vmul.f32 %v589, 1.442695
        %v593 = vpow.pop %v592
        %v594 = vsel %vm581, %v591, 0.0
        %595 = vadd.xlane.f32.xlu0 %v594
        %v596 = vpop.xlane.xlu0 %595
        %v597 = vsel %vm581, %v593, 0.0
        %598 = vadd.xlane.f32.xlu0 %v597
        %v599 = vpop.xlane.xlu0 %598
        %v600 = vrcp.pop %v596
        %v601 = vrcp.pop %v599
        %v602 = vmul.f32 %v591, %v600
        %v603 = vmul.f32 %v593, %v601
        %v604 = vpack.c.bf16 %v603, %v602
        %v605 = vpack.c.bf16 %v528, %v525
        %v607 = vsel %vm581, %v604, 0
        %609 = vmatprep.subr.bf16.mxu0 0
        %610 = vmatpush1.bf16.msra.mxu0 0
        %611 = vmatprep.subr.bf16.mxu0 0
        %612 = vmatpush1.bf16.msra.mxu0 0
        %613 = vmatprep.subr.bf16.mxu0 0
        %614 = vmatpush1.bf16.msra.mxu0 0
        %615 = vmatprep.subr.bf16.mxu0 0
        %616 = vmatpush1.bf16.msra.mxu0 0
        %617 = vmatprep.subr.bf16.mxu0 0
        %618 = vmatpush1.bf16.msra.mxu0 0
        %619 = vmatprep.subr.bf16.mxu0 0
        %620 = vmatpush1.bf16.msra.mxu0 0
        %621 = vmatprep.subr.bf16.mxu0 0
        %622 = vmatpush1.bf16.msra.mxu0 0
        %623 = vmatprep.subr.bf16.mxu0 0
        %624 = vmatpush1.bf16.msra.mxu0 %v605
        %625 = vmatprep.subr.bf16.mxu0 0
        %626 = vmatpush2.bf16.msra.mxu0 0
        %627 = vmatprep.subr.bf16.mxu0 0
        %628 = vmatpush2.bf16.msra.mxu0 0
        %629 = vmatprep.subr.bf16.mxu0 0
        %630 = vmatpush2.bf16.msra.mxu0 0
        %631 = vmatprep.subr.bf16.mxu0 0
        %632 = vmatpush2.bf16.msra.mxu0 0
        %633 = vmatprep.subr.bf16.mxu0 0
        %634 = vmatpush2.bf16.msra.mxu0 0
        %635 = vmatprep.subr.bf16.mxu0 0
        %636 = vmatpush2.bf16.msra.mxu0 0
        %637 = vmatprep.subr.bf16.mxu0 0
        %638 = vmatpush2.bf16.msra.mxu0 0
        %639 = vmatprep.subr.bf16.mxu0 0
        %640 = vmatpush2.bf16.msra.mxu0 0
        %641 = vmatprep.mubr.bf16.mxu0 0
        %642 = vmatmul.mubr.bf16.gmra.mxu0 %v607
        %v643 = vpop.f32.mrf.mxu0
        %v644 = vadd.f32 0.0, %v643
        %v645 = vpop.f32.mrf.mxu0
        %v646 = vpop.f32.mrf.mxu0
        %v647 = vadd.f32 0.0, %v646
        %v648 = vpop.f32.mrf.mxu0
        %649 = vdwg.mxu0
        %v650 = vpack.c.bf16 %v647, %v644
        %v651 = vld [vmem:[%s7] sm:$0xf]
        %s652 = scalar_lea.vmem %s1, 16
        %v653 = vld [vmem:[%s652] sm:$0xf]
        %v654 = vld [vmem:[%s652 + $0x4] sm:$0xf]
        %v655 = vld [vmem:[%s652 + $0x8] sm:$0xf]
        %v656 = vld [vmem:[%s652 + $0xc] sm:$0xf]
        %s657 = scalar_lea.vmem %s4, 1
        %v658 = vld [vmem:[%s657] sm:$0x1]
        %v660 = vlaneseq
        %v661 = vshrl.u32 %v660, 7
        %v662 = vsub.s32 0, %v661
        %v663 = vrot.slane %v658, %v662
        %v669 = vunpack.c.l.b16 %v653
        %v670 = vunpack.c.l.b16 %v654
        %v671 = vunpack.c.l.b16 %v655
        %v672 = vunpack.c.l.b16 %v656
        %v673 = vpack.c.b16 %v670, %v669
        %v674 = vpack.c.b16 %v672, %v671
        %677 = vmatprep.subr.bf16.mxu0 0
        %678 = vmatpush1.bf16.msra.mxu0 0
        %679 = vmatprep.subr.bf16.mxu0 0
        %680 = vmatpush1.bf16.msra.mxu0 0
        %681 = vmatprep.subr.bf16.mxu0 0
        %682 = vmatpush1.bf16.msra.mxu0 0
        %683 = vmatprep.subr.bf16.mxu0 0
        %684 = vmatpush1.bf16.msra.mxu0 0
        %685 = vmatprep.subr.bf16.mxu0 0
        %686 = vmatpush1.bf16.msra.mxu0 0
        %687 = vmatprep.subr.bf16.mxu0 0
        %688 = vmatpush1.bf16.msra.mxu0 0
        %689 = vmatprep.subr.bf16.mxu0 0
        %690 = vmatpush1.bf16.msra.mxu0 %v674
        %691 = vmatprep.subr.bf16.mxu0 0
        %692 = vmatpush1.bf16.msra.mxu0 %v673
        %693 = vmatprep.subr.bf16.mxu0 0
        %694 = vmatpush2.bf16.msra.mxu0 0
        %695 = vmatprep.subr.bf16.mxu0 0
        %696 = vmatpush2.bf16.msra.mxu0 0
        %697 = vmatprep.subr.bf16.mxu0 0
        %698 = vmatpush2.bf16.msra.mxu0 0
        %699 = vmatprep.subr.bf16.mxu0 0
        %700 = vmatpush2.bf16.msra.mxu0 0
        %701 = vmatprep.subr.bf16.mxu0 0
        %702 = vmatpush2.bf16.msra.mxu0 0
        %703 = vmatprep.subr.bf16.mxu0 0
        %704 = vmatpush2.bf16.msra.mxu0 0
        %705 = vmatprep.subr.bf16.mxu0 0
        %706 = vmatpush2.bf16.msra.mxu0 0
        %707 = vmatprep.subr.bf16.mxu0 0
        %708 = vmatpush2.bf16.msra.mxu0 0
        %709 = vmatprep.mubr.bf16.mxu0 0
        %710 = vmatmul.mubr.bf16.gmra.mxu0 %v360
        %v711 = vpop.f32.mrf.mxu0
        %v712 = vadd.f32 %v663, %v711
        %v713 = vpop.f32.mrf.mxu0
        %v714 = vpop.f32.mrf.mxu0
        %v715 = vadd.f32 %v663, %v714
        %v716 = vpop.f32.mrf.mxu0
        %717 = vdwg.mxu0
        %s718 = scalar_lea.vmem %s2, 16
        %v719 = vld [vmem:[%s718] sm:$0xf]
        %v720 = vld [vmem:[%s718 + $0x4] sm:$0xf]
        %v721 = vld [vmem:[%s718 + $0x8] sm:$0xf]
        %v722 = vld [vmem:[%s718 + $0xc] sm:$0xf]
        %s723 = scalar_lea.vmem %s5, 1
        %v724 = vld [vmem:[%s723] sm:$0x1]
        %v726 = vlaneseq
        %v727 = vshrl.u32 %v726, 7
        %v728 = vsub.s32 0, %v727
        %v729 = vrot.slane %v724, %v728
        %v735 = vunpack.c.l.b16 %v719
        %v736 = vunpack.c.l.b16 %v720
        %v737 = vunpack.c.l.b16 %v721
        %v738 = vunpack.c.l.b16 %v722
        %v739 = vpack.c.b16 %v736, %v735
        %v740 = vpack.c.b16 %v738, %v737
        %743 = vmatprep.subr.bf16.mxu0 0
        %744 = vmatpush1.bf16.msra.mxu0 0
        %745 = vmatprep.subr.bf16.mxu0 0
        %746 = vmatpush1.bf16.msra.mxu0 0
        %747 = vmatprep.subr.bf16.mxu0 0
        %748 = vmatpush1.bf16.msra.mxu0 0
        %749 = vmatprep.subr.bf16.mxu0 0
        %750 = vmatpush1.bf16.msra.mxu0 0
        %751 = vmatprep.subr.bf16.mxu0 0
        %752 = vmatpush1.bf16.msra.mxu0 0
        %753 = vmatprep.subr.bf16.mxu0 0
        %754 = vmatpush1.bf16.msra.mxu0 0
        %755 = vmatprep.subr.bf16.mxu0 0
        %756 = vmatpush1.bf16.msra.mxu0 %v740
        %757 = vmatprep.subr.bf16.mxu0 0
        %758 = vmatpush1.bf16.msra.mxu0 %v739
        %759 = vmatprep.subr.bf16.mxu0 0
        %760 = vmatpush2.bf16.msra.mxu0 0
        %761 = vmatprep.subr.bf16.mxu0 0
        %762 = vmatpush2.bf16.msra.mxu0 0
        %763 = vmatprep.subr.bf16.mxu0 0
        %764 = vmatpush2.bf16.msra.mxu0 0
        %765 = vmatprep.subr.bf16.mxu0 0
        %766 = vmatpush2.bf16.msra.mxu0 0
        %767 = vmatprep.subr.bf16.mxu0 0
        %768 = vmatpush2.bf16.msra.mxu0 0
        %769 = vmatprep.subr.bf16.mxu0 0
        %770 = vmatpush2.bf16.msra.mxu0 0
        %771 = vmatprep.subr.bf16.mxu0 0
        %772 = vmatpush2.bf16.msra.mxu0 0
        %773 = vmatprep.subr.bf16.mxu0 0
        %774 = vmatpush2.bf16.msra.mxu0 0
        %775 = vmatprep.mubr.bf16.mxu0 0
        %776 = vmatmul.mubr.bf16.gmra.mxu0 %v360
        %v777 = vpop.f32.mrf.mxu0
        %v778 = vadd.f32 %v729, %v777
        %v779 = vpop.f32.mrf.mxu0
        %v780 = vpop.f32.mrf.mxu0
        %v781 = vadd.f32 %v729, %v780
        %v782 = vpop.f32.mrf.mxu0
        %783 = vdwg.mxu0
        %s784 = scalar_lea.vmem %s3, 16
        %v785 = vld [vmem:[%s784] sm:$0xf]
        %v786 = vld [vmem:[%s784 + $0x4] sm:$0xf]
        %v787 = vld [vmem:[%s784 + $0x8] sm:$0xf]
        %v788 = vld [vmem:[%s784 + $0xc] sm:$0xf]
        %s789 = scalar_lea.vmem %s6, 1
        %v790 = vld [vmem:[%s789] sm:$0x1]
        %v792 = vlaneseq
        %v793 = vshrl.u32 %v792, 7
        %v794 = vsub.s32 0, %v793
        %v795 = vrot.slane %v790, %v794
        %v801 = vunpack.c.l.b16 %v785
        %v802 = vunpack.c.l.b16 %v786
        %v803 = vunpack.c.l.b16 %v787
        %v804 = vunpack.c.l.b16 %v788
        %v805 = vpack.c.b16 %v802, %v801
        %v806 = vpack.c.b16 %v804, %v803
        %809 = vmatprep.subr.bf16.mxu0 0
        %810 = vmatpush1.bf16.msra.mxu0 0
        %811 = vmatprep.subr.bf16.mxu0 0
        %812 = vmatpush1.bf16.msra.mxu0 0
        %813 = vmatprep.subr.bf16.mxu0 0
        %814 = vmatpush1.bf16.msra.mxu0 0
        %815 = vmatprep.subr.bf16.mxu0 0
        %816 = vmatpush1.bf16.msra.mxu0 0
        %817 = vmatprep.subr.bf16.mxu0 0
        %818 = vmatpush1.bf16.msra.mxu0 0
        %819 = vmatprep.subr.bf16.mxu0 0
        %820 = vmatpush1.bf16.msra.mxu0 0
        %821 = vmatprep.subr.bf16.mxu0 0
        %822 = vmatpush1.bf16.msra.mxu0 %v806
        %823 = vmatprep.subr.bf16.mxu0 0
        %824 = vmatpush1.bf16.msra.mxu0 %v805
        %825 = vmatprep.subr.bf16.mxu0 0
        %826 = vmatpush2.bf16.msra.mxu0 0
        %827 = vmatprep.subr.bf16.mxu0 0
        %828 = vmatpush2.bf16.msra.mxu0 0
        %829 = vmatprep.subr.bf16.mxu0 0
        %830 = vmatpush2.bf16.msra.mxu0 0
        %831 = vmatprep.subr.bf16.mxu0 0
        %832 = vmatpush2.bf16.msra.mxu0 0
        %833 = vmatprep.subr.bf16.mxu0 0
        %834 = vmatpush2.bf16.msra.mxu0 0
        %835 = vmatprep.subr.bf16.mxu0 0
        %836 = vmatpush2.bf16.msra.mxu0 0
        %837 = vmatprep.subr.bf16.mxu0 0
        %838 = vmatpush2.bf16.msra.mxu0 0
        %839 = vmatprep.subr.bf16.mxu0 0
        %840 = vmatpush2.bf16.msra.mxu0 0
        %841 = vmatprep.mubr.bf16.mxu0 0
        %842 = vmatmul.mubr.bf16.gmra.mxu0 %v360
        %v843 = vpop.f32.mrf.mxu0
        %v844 = vadd.f32 %v795, %v843
        %v845 = vpop.f32.mrf.mxu0
        %v846 = vpop.f32.mrf.mxu0
        %v847 = vadd.f32 %v795, %v846
        %v848 = vpop.f32.mrf.mxu0
        %849 = vdwg.mxu0
        %v850 = vpack.c.bf16 %v715, %v712
        %v851 = vpack.c.bf16 %v781, %v778
        %v853 = vsel %vm533, %v850, 0
        %v856 = vsel %vm533, %v851, 0
        %858 = vmatprep.subr.bf16.mxu0 0
        %859 = vmatpush1.bf16.xpose.msra.mxu0 0
        %860 = vmatprep.subr.bf16.mxu0 0
        %861 = vmatpush1.bf16.xpose.msra.mxu0 0
        %862 = vmatprep.subr.bf16.mxu0 0
        %863 = vmatpush1.bf16.xpose.msra.mxu0 0
        %864 = vmatprep.subr.bf16.mxu0 0
        %865 = vmatpush1.bf16.xpose.msra.mxu0 0
        %866 = vmatprep.subr.bf16.mxu0 0
        %867 = vmatpush1.bf16.xpose.msra.mxu0 0
        %868 = vmatprep.subr.bf16.mxu0 0
        %869 = vmatpush1.bf16.xpose.msra.mxu0 0
        %870 = vmatprep.subr.bf16.mxu0 0
        %871 = vmatpush1.bf16.xpose.msra.mxu0 0
        %872 = vmatprep.subr.bf16.mxu0 0
        %873 = vmatpush1.bf16.xpose.msra.mxu0 %v856
        %874 = vmatprep.subr.bf16.mxu0 0
        %875 = vmatpush2.bf16.xpose.msra.mxu0 0
        %876 = vmatprep.subr.bf16.mxu0 0
        %877 = vmatpush2.bf16.xpose.msra.mxu0 0
        %878 = vmatprep.subr.bf16.mxu0 0
        %879 = vmatpush2.bf16.xpose.msra.mxu0 0
        %880 = vmatprep.subr.bf16.mxu0 0
        %881 = vmatpush2.bf16.xpose.msra.mxu0 0
        %882 = vmatprep.subr.bf16.mxu0 0
        %883 = vmatpush2.bf16.xpose.msra.mxu0 0
        %884 = vmatprep.subr.bf16.mxu0 0
        %885 = vmatpush2.bf16.xpose.msra.mxu0 0
        %886 = vmatprep.subr.bf16.mxu0 0
        %887 = vmatpush2.bf16.xpose.msra.mxu0 0
        %888 = vmatprep.subr.bf16.mxu0 0
        %889 = vmatpush2.bf16.xpose.msra.mxu0 0
        %890 = vmatprep.mubr.bf16.mxu0 0
        %891 = vmatmul.mubr.bf16.gmra.mxu0 %v853
        %v892 = vpop.f32.mrf.mxu0
        %v893 = vadd.f32 0.0, %v892
        %v894 = vpop.f32.mrf.mxu0
        %v895 = vpop.f32.mrf.mxu0
        %v896 = vadd.f32 0.0, %v895
        %v897 = vpop.f32.mrf.mxu0
        %898 = vdwg.mxu0
        %v899 = vsel %vm581, %v893, -inf
        %900 = vmax.xlane.f32.xlu0 %v899
        %v901 = vpop.xlane.xlu0 %900
        %v902 = vsel %vm581, %v896, -inf
        %903 = vmax.xlane.f32.xlu0 %v902
        %v904 = vpop.xlane.xlu0 %903
        %v905 = vsub.f32 %v893, %v901
        %v906 = vsub.f32 %v896, %v904
        %v907 = vmul.f32 %v905, 1.442695
        %v908 = vpow.pop %v907
        %v909 = vmul.f32 %v906, 1.442695
        %v910 = vpow.pop %v909
        %v911 = vsel %vm581, %v908, 0.0
        %912 = vadd.xlane.f32.xlu0 %v911
        %v913 = vpop.xlane.xlu0 %912
        %v914 = vsel %vm581, %v910, 0.0
        %915 = vadd.xlane.f32.xlu0 %v914
        %v916 = vpop.xlane.xlu0 %915
        %v917 = vrcp.pop %v913
        %v918 = vrcp.pop %v916
        %v919 = vmul.f32 %v908, %v917
        %v920 = vmul.f32 %v910, %v918
        %v921 = vpack.c.bf16 %v920, %v919
        %v922 = vpack.c.bf16 %v847, %v844
        %v924 = vsel %vm581, %v921, 0
        %926 = vmatprep.subr.bf16.mxu0 0
        %927 = vmatpush1.bf16.msra.mxu0 0
        %928 = vmatprep.subr.bf16.mxu0 0
        %929 = vmatpush1.bf16.msra.mxu0 0
        %930 = vmatprep.subr.bf16.mxu0 0
        %931 = vmatpush1.bf16.msra.mxu0 0
        %932 = vmatprep.subr.bf16.mxu0 0
        %933 = vmatpush1.bf16.msra.mxu0 0
        %934 = vmatprep.subr.bf16.mxu0 0
        %935 = vmatpush1.bf16.msra.mxu0 0
        %936 = vmatprep.subr.bf16.mxu0 0
        %937 = vmatpush1.bf16.msra.mxu0 0
        %938 = vmatprep.subr.bf16.mxu0 0
        %939 = vmatpush1.bf16.msra.mxu0 0
        %940 = vmatprep.subr.bf16.mxu0 0
        %941 = vmatpush1.bf16.msra.mxu0 %v922
        %942 = vmatprep.subr.bf16.mxu0 0
        %943 = vmatpush2.bf16.msra.mxu0 0
        %944 = vmatprep.subr.bf16.mxu0 0
        %945 = vmatpush2.bf16.msra.mxu0 0
        %946 = vmatprep.subr.bf16.mxu0 0
        %947 = vmatpush2.bf16.msra.mxu0 0
        %948 = vmatprep.subr.bf16.mxu0 0
        %949 = vmatpush2.bf16.msra.mxu0 0
        %950 = vmatprep.subr.bf16.mxu0 0
        %951 = vmatpush2.bf16.msra.mxu0 0
        %952 = vmatprep.subr.bf16.mxu0 0
        %953 = vmatpush2.bf16.msra.mxu0 0
        %954 = vmatprep.subr.bf16.mxu0 0
        %955 = vmatpush2.bf16.msra.mxu0 0
        %956 = vmatprep.subr.bf16.mxu0 0
        %957 = vmatpush2.bf16.msra.mxu0 0
        %958 = vmatprep.mubr.bf16.mxu0 0
        %959 = vmatmul.mubr.bf16.gmra.mxu0 %v924
        %v960 = vpop.f32.mrf.mxu0
        %v961 = vadd.f32 0.0, %v960
        %v962 = vpop.f32.mrf.mxu0
        %v963 = vpop.f32.mrf.mxu0
        %v964 = vadd.f32 0.0, %v963
        %v965 = vpop.f32.mrf.mxu0
        %966 = vdwg.mxu0
        %v967 = vpack.c.bf16 %v964, %v961
        %s968 = scalar_lea.vmem %s7, 4
        %v969 = vld [vmem:[%s968] sm:$0xf]
        %v971 = vsel %vm533, %v967, 0
        %vm973 = vcmask 1043456
        %v975 = vsel %vm973, %v969, 0
        %977 = vmatprep.subr.bf16.mxu0 0
        %978 = vmatpush1.bf16.msra.mxu0 0
        %979 = vmatprep.subr.bf16.mxu0 0
        %980 = vmatpush1.bf16.msra.mxu0 0
        %981 = vmatprep.subr.bf16.mxu0 0
        %982 = vmatpush1.bf16.msra.mxu0 0
        %983 = vmatprep.subr.bf16.mxu0 0
        %984 = vmatpush1.bf16.msra.mxu0 0
        %985 = vmatprep.subr.bf16.mxu0 0
        %986 = vmatpush1.bf16.msra.mxu0 0
        %987 = vmatprep.subr.bf16.mxu0 0
        %988 = vmatpush1.bf16.msra.mxu0 0
        %989 = vmatprep.subr.bf16.mxu0 0
        %990 = vmatpush1.bf16.msra.mxu0 0
        %991 = vmatprep.subr.bf16.mxu0 0
        %992 = vmatpush1.bf16.msra.mxu0 %v975
        %993 = vmatprep.subr.bf16.mxu0 0
        %994 = vmatpush2.bf16.msra.mxu0 0
        %995 = vmatprep.subr.bf16.mxu0 0
        %996 = vmatpush2.bf16.msra.mxu0 0
        %997 = vmatprep.subr.bf16.mxu0 0
        %998 = vmatpush2.bf16.msra.mxu0 0
        %999 = vmatprep.subr.bf16.mxu0 0
        %1000 = vmatpush2.bf16.msra.mxu0 0
        %1001 = vmatprep.subr.bf16.mxu0 0
        %1002 = vmatpush2.bf16.msra.mxu0 0
        %1003 = vmatprep.subr.bf16.mxu0 0
        %1004 = vmatpush2.bf16.msra.mxu0 0
        %1005 = vmatprep.subr.bf16.mxu0 0
        %1006 = vmatpush2.bf16.msra.mxu0 0
        %1007 = vmatprep.subr.bf16.mxu0 0
        %1008 = vmatpush2.bf16.msra.mxu0 0
        %1009 = vmatprep.mubr.bf16.mxu0 0
        %1010 = vmatmul.mubr.bf16.gmra.mxu0 %v971
        %v1011 = vpop.f32.mrf.mxu0
        %v1012 = vadd.f32 0.0, %v1011
        %v1013 = vpop.f32.mrf.mxu0
        %v1014 = vpop.f32.mrf.mxu0
        %v1015 = vadd.f32 0.0, %v1014
        %v1016 = vpop.f32.mrf.mxu0
        %1017 = vdwg.mxu0
        %v1019 = vsel %vm533, %v650, 0
        %v1022 = vsel %vm973, %v651, 0
        %1024 = vmatprep.subr.bf16.mxu0 0
        %1025 = vmatpush1.bf16.msra.mxu0 0
        %1026 = vmatprep.subr.bf16.mxu0 0
        %1027 = vmatpush1.bf16.msra.mxu0 0
        %1028 = vmatprep.subr.bf16.mxu0 0
        %1029 = vmatpush1.bf16.msra.mxu0 0
        %1030 = vmatprep.subr.bf16.mxu0 0
        %1031 = vmatpush1.bf16.msra.mxu0 0
        %1032 = vmatprep.subr.bf16.mxu0 0
        %1033 = vmatpush1.bf16.msra.mxu0 0
        %1034 = vmatprep.subr.bf16.mxu0 0
        %1035 = vmatpush1.bf16.msra.mxu0 0
        %1036 = vmatprep.subr.bf16.mxu0 0
        %1037 = vmatpush1.bf16.msra.mxu0 0
        %1038 = vmatprep.subr.bf16.mxu0 0
        %1039 = vmatpush1.bf16.msra.mxu0 %v1022
        %1040 = vmatprep.subr.bf16.mxu0 0
        %1041 = vmatpush2.bf16.msra.mxu0 0
        %1042 = vmatprep.subr.bf16.mxu0 0
        %1043 = vmatpush2.bf16.msra.mxu0 0
        %1044 = vmatprep.subr.bf16.mxu0 0
        %1045 = vmatpush2.bf16.msra.mxu0 0
        %1046 = vmatprep.subr.bf16.mxu0 0
        %1047 = vmatpush2.bf16.msra.mxu0 0
        %1048 = vmatprep.subr.bf16.mxu0 0
        %1049 = vmatpush2.bf16.msra.mxu0 0
        %1050 = vmatprep.subr.bf16.mxu0 0
        %1051 = vmatpush2.bf16.msra.mxu0 0
        %1052 = vmatprep.subr.bf16.mxu0 0
        %1053 = vmatpush2.bf16.msra.mxu0 0
        %1054 = vmatprep.subr.bf16.mxu0 0
        %1055 = vmatpush2.bf16.msra.mxu0 0
        %1056 = vmatprep.mubr.bf16.mxu0 0
        %1057 = vmatmul.mubr.bf16.gmra.mxu0 %v1019
        %v1058 = vpop.f32.mrf.mxu0
        %v1059 = vadd.f32 %v1012, %v1058
        %v1060 = vpop.f32.mrf.mxu0
        %v1061 = vpop.f32.mrf.mxu0
        %v1062 = vadd.f32 %v1015, %v1061
        %v1063 = vpop.f32.mrf.mxu0
        %1064 = vdwg.mxu0
        %s1065 = scalar_lea.vmem %s1, 32
        %v1066 = vld [vmem:[%s1065] sm:$0xf]
        %v1067 = vld [vmem:[%s1065 + $0x4] sm:$0xf]
        %v1068 = vld [vmem:[%s1065 + $0x8] sm:$0xf]
        %v1069 = vld [vmem:[%s1065 + $0xc] sm:$0xf]
        %s1070 = scalar_lea.vmem %s4, 2
        %v1071 = vld [vmem:[%s1070] sm:$0x1]
        %v1073 = vlaneseq
        %v1074 = vshrl.u32 %v1073, 7
        %v1075 = vsub.s32 0, %v1074
        %v1076 = vrot.slane %v1071, %v1075
        %v1082 = vunpack.c.l.b16 %v1066
        %v1083 = vunpack.c.l.b16 %v1067
        %v1084 = vunpack.c.l.b16 %v1068
        %v1085 = vunpack.c.l.b16 %v1069
        %v1086 = vpack.c.b16 %v1083, %v1082
        %v1087 = vpack.c.b16 %v1085, %v1084
        %1090 = vmatprep.subr.bf16.mxu0 0
        %1091 = vmatpush1.bf16.msra.mxu0 0
        %1092 = vmatprep.subr.bf16.mxu0 0
        %1093 = vmatpush1.bf16.msra.mxu0 0
        %1094 = vmatprep.subr.bf16.mxu0 0
        %1095 = vmatpush1.bf16.msra.mxu0 0
        %1096 = vmatprep.subr.bf16.mxu0 0
        %1097 = vmatpush1.bf16.msra.mxu0 0
        %1098 = vmatprep.subr.bf16.mxu0 0
        %1099 = vmatpush1.bf16.msra.mxu0 0
        %1100 = vmatprep.subr.bf16.mxu0 0
        %1101 = vmatpush1.bf16.msra.mxu0 0
        %1102 = vmatprep.subr.bf16.mxu0 0
        %1103 = vmatpush1.bf16.msra.mxu0 %v1087
        %1104 = vmatprep.subr.bf16.mxu0 0
        %1105 = vmatpush1.bf16.msra.mxu0 %v1086
        %1106 = vmatprep.subr.bf16.mxu0 0
        %1107 = vmatpush2.bf16.msra.mxu0 0
        %1108 = vmatprep.subr.bf16.mxu0 0
        %1109 = vmatpush2.bf16.msra.mxu0 0
        %1110 = vmatprep.subr.bf16.mxu0 0
        %1111 = vmatpush2.bf16.msra.mxu0 0
        %1112 = vmatprep.subr.bf16.mxu0 0
        %1113 = vmatpush2.bf16.msra.mxu0 0
        %1114 = vmatprep.subr.bf16.mxu0 0
        %1115 = vmatpush2.bf16.msra.mxu0 0
        %1116 = vmatprep.subr.bf16.mxu0 0
        %1117 = vmatpush2.bf16.msra.mxu0 0
        %1118 = vmatprep.subr.bf16.mxu0 0
        %1119 = vmatpush2.bf16.msra.mxu0 0
        %1120 = vmatprep.subr.bf16.mxu0 0
        %1121 = vmatpush2.bf16.msra.mxu0 0
        %1122 = vmatprep.mubr.bf16.mxu0 0
        %1123 = vmatmul.mubr.bf16.gmra.mxu0 %v360
        %v1124 = vpop.f32.mrf.mxu0
        %v1125 = vadd.f32 %v1076, %v1124
        %v1126 = vpop.f32.mrf.mxu0
        %v1127 = vpop.f32.mrf.mxu0
        %v1128 = vadd.f32 %v1076, %v1127
        %v1129 = vpop.f32.mrf.mxu0
        %1130 = vdwg.mxu0
        %s1131 = scalar_lea.vmem %s2, 32
        %v1132 = vld [vmem:[%s1131] sm:$0xf]
        %v1133 = vld [vmem:[%s1131 + $0x4] sm:$0xf]
        %v1134 = vld [vmem:[%s1131 + $0x8] sm:$0xf]
        %v1135 = vld [vmem:[%s1131 + $0xc] sm:$0xf]
        %s1136 = scalar_lea.vmem %s5, 2
        %v1137 = vld [vmem:[%s1136] sm:$0x1]
        %v1139 = vlaneseq
        %v1140 = vshrl.u32 %v1139, 7
        %v1141 = vsub.s32 0, %v1140
        %v1142 = vrot.slane %v1137, %v1141
        %v1148 = vunpack.c.l.b16 %v1132
        %v1149 = vunpack.c.l.b16 %v1133
        %v1150 = vunpack.c.l.b16 %v1134
        %v1151 = vunpack.c.l.b16 %v1135
        %v1152 = vpack.c.b16 %v1149, %v1148
        %v1153 = vpack.c.b16 %v1151, %v1150
        %1156 = vmatprep.subr.bf16.mxu0 0
        %1157 = vmatpush1.bf16.msra.mxu0 0
        %1158 = vmatprep.subr.bf16.mxu0 0
        %1159 = vmatpush1.bf16.msra.mxu0 0
        %1160 = vmatprep.subr.bf16.mxu0 0
        %1161 = vmatpush1.bf16.msra.mxu0 0
        %1162 = vmatprep.subr.bf16.mxu0 0
        %1163 = vmatpush1.bf16.msra.mxu0 0
        %1164 = vmatprep.subr.bf16.mxu0 0
        %1165 = vmatpush1.bf16.msra.mxu0 0
        %1166 = vmatprep.subr.bf16.mxu0 0
        %1167 = vmatpush1.bf16.msra.mxu0 0
        %1168 = vmatprep.subr.bf16.mxu0 0
        %1169 = vmatpush1.bf16.msra.mxu0 %v1153
        %1170 = vmatprep.subr.bf16.mxu0 0
        %1171 = vmatpush1.bf16.msra.mxu0 %v1152
        %1172 = vmatprep.subr.bf16.mxu0 0
        %1173 = vmatpush2.bf16.msra.mxu0 0
        %1174 = vmatprep.subr.bf16.mxu0 0
        %1175 = vmatpush2.bf16.msra.mxu0 0
        %1176 = vmatprep.subr.bf16.mxu0 0
        %1177 = vmatpush2.bf16.msra.mxu0 0
        %1178 = vmatprep.subr.bf16.mxu0 0
        %1179 = vmatpush2.bf16.msra.mxu0 0
        %1180 = vmatprep.subr.bf16.mxu0 0
        %1181 = vmatpush2.bf16.msra.mxu0 0
        %1182 = vmatprep.subr.bf16.mxu0 0
        %1183 = vmatpush2.bf16.msra.mxu0 0
        %1184 = vmatprep.subr.bf16.mxu0 0
        %1185 = vmatpush2.bf16.msra.mxu0 0
        %1186 = vmatprep.subr.bf16.mxu0 0
        %1187 = vmatpush2.bf16.msra.mxu0 0
        %1188 = vmatprep.mubr.bf16.mxu0 0
        %1189 = vmatmul.mubr.bf16.gmra.mxu0 %v360
        %v1190 = vpop.f32.mrf.mxu0
        %v1191 = vadd.f32 %v1142, %v1190
        %v1192 = vpop.f32.mrf.mxu0
        %v1193 = vpop.f32.mrf.mxu0
        %v1194 = vadd.f32 %v1142, %v1193
        %v1195 = vpop.f32.mrf.mxu0
        %1196 = vdwg.mxu0
        %s1197 = scalar_lea.vmem %s3, 32
        %v1198 = vld [vmem:[%s1197] sm:$0xf]
        %v1199 = vld [vmem:[%s1197 + $0x4] sm:$0xf]
        %v1200 = vld [vmem:[%s1197 + $0x8] sm:$0xf]
        %v1201 = vld [vmem:[%s1197 + $0xc] sm:$0xf]
        %s1202 = scalar_lea.vmem %s6, 2
        %v1203 = vld [vmem:[%s1202] sm:$0x1]
        %v1205 = vlaneseq
        %v1206 = vshrl.u32 %v1205, 7
        %v1207 = vsub.s32 0, %v1206
        %v1208 = vrot.slane %v1203, %v1207
        %v1214 = vunpack.c.l.b16 %v1198
        %v1215 = vunpack.c.l.b16 %v1199
        %v1216 = vunpack.c.l.b16 %v1200
        %v1217 = vunpack.c.l.b16 %v1201
        %v1218 = vpack.c.b16 %v1215, %v1214
        %v1219 = vpack.c.b16 %v1217, %v1216
        %1222 = vmatprep.subr.bf16.mxu0 0
        %1223 = vmatpush1.bf16.msra.mxu0 0
        %1224 = vmatprep.subr.bf16.mxu0 0
        %1225 = vmatpush1.bf16.msra.mxu0 0
        %1226 = vmatprep.subr.bf16.mxu0 0
        %1227 = vmatpush1.bf16.msra.mxu0 0
        %1228 = vmatprep.subr.bf16.mxu0 0
        %1229 = vmatpush1.bf16.msra.mxu0 0
        %1230 = vmatprep.subr.bf16.mxu0 0
        %1231 = vmatpush1.bf16.msra.mxu0 0
        %1232 = vmatprep.subr.bf16.mxu0 0
        %1233 = vmatpush1.bf16.msra.mxu0 0
        %1234 = vmatprep.subr.bf16.mxu0 0
        %1235 = vmatpush1.bf16.msra.mxu0 %v1219
        %1236 = vmatprep.subr.bf16.mxu0 0
        %1237 = vmatpush1.bf16.msra.mxu0 %v1218
        %1238 = vmatprep.subr.bf16.mxu0 0
        %1239 = vmatpush2.bf16.msra.mxu0 0
        %1240 = vmatprep.subr.bf16.mxu0 0
        %1241 = vmatpush2.bf16.msra.mxu0 0
        %1242 = vmatprep.subr.bf16.mxu0 0
        %1243 = vmatpush2.bf16.msra.mxu0 0
        %1244 = vmatprep.subr.bf16.mxu0 0
        %1245 = vmatpush2.bf16.msra.mxu0 0
        %1246 = vmatprep.subr.bf16.mxu0 0
        %1247 = vmatpush2.bf16.msra.mxu0 0
        %1248 = vmatprep.subr.bf16.mxu0 0
        %1249 = vmatpush2.bf16.msra.mxu0 0
        %1250 = vmatprep.subr.bf16.mxu0 0
        %1251 = vmatpush2.bf16.msra.mxu0 0
        %1252 = vmatprep.subr.bf16.mxu0 0
        %1253 = vmatpush2.bf16.msra.mxu0 0
        %1254 = vmatprep.mubr.bf16.mxu0 0
        %1255 = vmatmul.mubr.bf16.gmra.mxu0 %v360
        %v1256 = vpop.f32.mrf.mxu0
        %v1257 = vadd.f32 %v1208, %v1256
        %v1258 = vpop.f32.mrf.mxu0
        %v1259 = vpop.f32.mrf.mxu0
        %v1260 = vadd.f32 %v1208, %v1259
        %v1261 = vpop.f32.mrf.mxu0
        %1262 = vdwg.mxu0
        %v1263 = vpack.c.bf16 %v1128, %v1125
        %v1264 = vpack.c.bf16 %v1194, %v1191
        %v1266 = vsel %vm533, %v1263, 0
        %v1269 = vsel %vm533, %v1264, 0
        %1271 = vmatprep.subr.bf16.mxu0 0
        %1272 = vmatpush1.bf16.xpose.msra.mxu0 0
        %1273 = vmatprep.subr.bf16.mxu0 0
        %1274 = vmatpush1.bf16.xpose.msra.mxu0 0
        %1275 = vmatprep.subr.bf16.mxu0 0
        %1276 = vmatpush1.bf16.xpose.msra.mxu0 0
        %1277 = vmatprep.subr.bf16.mxu0 0
        %1278 = vmatpush1.bf16.xpose.msra.mxu0 0
        %1279 = vmatprep.subr.bf16.mxu0 0
        %1280 = vmatpush1.bf16.xpose.msra.mxu0 0
        %1281 = vmatprep.subr.bf16.mxu0 0
        %1282 = vmatpush1.bf16.xpose.msra.mxu0 0
        %1283 = vmatprep.subr.bf16.mxu0 0
        %1284 = vmatpush1.bf16.xpose.msra.mxu0 0
        %1285 = vmatprep.subr.bf16.mxu0 0
        %1286 = vmatpush1.bf16.xpose.msra.mxu0 %v1269
        %1287 = vmatprep.subr.bf16.mxu0 0
        %1288 = vmatpush2.bf16.xpose.msra.mxu0 0
        %1289 = vmatprep.subr.bf16.mxu0 0
        %1290 = vmatpush2.bf16.xpose.msra.mxu0 0
        %1291 = vmatprep.subr.bf16.mxu0 0
        %1292 = vmatpush2.bf16.xpose.msra.mxu0 0
        %1293 = vmatprep.subr.bf16.mxu0 0
        %1294 = vmatpush2.bf16.xpose.msra.mxu0 0
        %1295 = vmatprep.subr.bf16.mxu0 0
        %1296 = vmatpush2.bf16.xpose.msra.mxu0 0
        %1297 = vmatprep.subr.bf16.mxu0 0
        %1298 = vmatpush2.bf16.xpose.msra.mxu0 0
        %1299 = vmatprep.subr.bf16.mxu0 0
        %1300 = vmatpush2.bf16.xpose.msra.mxu0 0
        %1301 = vmatprep.subr.bf16.mxu0 0
        %1302 = vmatpush2.bf16.xpose.msra.mxu0 0
        %1303 = vmatprep.mubr.bf16.mxu0 0
        %1304 = vmatmul.mubr.bf16.gmra.mxu0 %v1266
        %v1305 = vpop.f32.mrf.mxu0
        %v1306 = vadd.f32 0.0, %v1305
        %v1307 = vpop.f32.mrf.mxu0
        %v1308 = vpop.f32.mrf.mxu0
        %v1309 = vadd.f32 0.0, %v1308
        %v1310 = vpop.f32.mrf.mxu0
        %1311 = vdwg.mxu0
        %v1312 = vsel %vm581, %v1306, -inf
        %1313 = vmax.xlane.f32.xlu0 %v1312
        %v1314 = vpop.xlane.xlu0 %1313
        %v1315 = vsel %vm581, %v1309, -inf
        %1316 = vmax.xlane.f32.xlu0 %v1315
        %v1317 = vpop.xlane.xlu0 %1316
        %v1318 = vsub.f32 %v1306, %v1314
        %v1319 = vsub.f32 %v1309, %v1317
        %v1320 = vmul.f32 %v1318, 1.442695
        %v1321 = vpow.pop %v1320
        %v1322 = vmul.f32 %v1319, 1.442695
        %v1323 = vpow.pop %v1322
        %v1324 = vsel %vm581, %v1321, 0.0
        %1325 = vadd.xlane.f32.xlu0 %v1324
        %v1326 = vpop.xlane.xlu0 %1325
        %v1327 = vsel %vm581, %v1323, 0.0
        %1328 = vadd.xlane.f32.xlu0 %v1327
        %v1329 = vpop.xlane.xlu0 %1328
        %v1330 = vrcp.pop %v1326
        %v1331 = vrcp.pop %v1329
        %v1332 = vmul.f32 %v1321, %v1330
        %v1333 = vmul.f32 %v1323, %v1331
        %v1334 = vpack.c.bf16 %v1333, %v1332
        %v1335 = vpack.c.bf16 %v1260, %v1257
        %v1337 = vsel %vm581, %v1334, 0
        %1339 = vmatprep.subr.bf16.mxu0 0
        %1340 = vmatpush1.bf16.msra.mxu0 0
        %1341 = vmatprep.subr.bf16.mxu0 0
        %1342 = vmatpush1.bf16.msra.mxu0 0
        %1343 = vmatprep.subr.bf16.mxu0 0
        %1344 = vmatpush1.bf16.msra.mxu0 0
        %1345 = vmatprep.subr.bf16.mxu0 0
        %1346 = vmatpush1.bf16.msra.mxu0 0
        %1347 = vmatprep.subr.bf16.mxu0 0
        %1348 = vmatpush1.bf16.msra.mxu0 0
        %1349 = vmatprep.subr.bf16.mxu0 0
        %1350 = vmatpush1.bf16.msra.mxu0 0
        %1351 = vmatprep.subr.bf16.mxu0 0
        %1352 = vmatpush1.bf16.msra.mxu0 0
        %1353 = vmatprep.subr.bf16.mxu0 0
        %1354 = vmatpush1.bf16.msra.mxu0 %v1335
        %1355 = vmatprep.subr.bf16.mxu0 0
        %1356 = vmatpush2.bf16.msra.mxu0 0
        %1357 = vmatprep.subr.bf16.mxu0 0
        %1358 = vmatpush2.bf16.msra.mxu0 0
        %1359 = vmatprep.subr.bf16.mxu0 0
        %1360 = vmatpush2.bf16.msra.mxu0 0
        %1361 = vmatprep.subr.bf16.mxu0 0
        %1362 = vmatpush2.bf16.msra.mxu0 0
        %1363 = vmatprep.subr.bf16.mxu0 0
        %1364 = vmatpush2.bf16.msra.mxu0 0
        %1365 = vmatprep.subr.bf16.mxu0 0
        %1366 = vmatpush2.bf16.msra.mxu0 0
        %1367 = vmatprep.subr.bf16.mxu0 0
        %1368 = vmatpush2.bf16.msra.mxu0 0
        %1369 = vmatprep.subr.bf16.mxu0 0
        %1370 = vmatpush2.bf16.msra.mxu0 0
        %1371 = vmatprep.mubr.bf16.mxu0 0
        %1372 = vmatmul.mubr.bf16.gmra.mxu0 %v1337
        %v1373 = vpop.f32.mrf.mxu0
        %v1374 = vadd.f32 0.0, %v1373
        %v1375 = vpop.f32.mrf.mxu0
        %v1376 = vpop.f32.mrf.mxu0
        %v1377 = vadd.f32 0.0, %v1376
        %v1378 = vpop.f32.mrf.mxu0
        %1379 = vdwg.mxu0
        %v1380 = vpack.c.bf16 %v1377, %v1374
        %s1381 = scalar_lea.vmem %s7, 8
        %v1382 = vld [vmem:[%s1381] sm:$0xf]
        %v1384 = vsel %vm533, %v1380, 0
        %v1387 = vsel %vm973, %v1382, 0
        %1389 = vmatprep.subr.bf16.mxu0 0
        %1390 = vmatpush1.bf16.msra.mxu0 0
        %1391 = vmatprep.subr.bf16.mxu0 0
        %1392 = vmatpush1.bf16.msra.mxu0 0
        %1393 = vmatprep.subr.bf16.mxu0 0
        %1394 = vmatpush1.bf16.msra.mxu0 0
        %1395 = vmatprep.subr.bf16.mxu0 0
        %1396 = vmatpush1.bf16.msra.mxu0 0
        %1397 = vmatprep.subr.bf16.mxu0 0
        %1398 = vmatpush1.bf16.msra.mxu0 0
        %1399 = vmatprep.subr.bf16.mxu0 0
        %1400 = vmatpush1.bf16.msra.mxu0 0
        %1401 = vmatprep.subr.bf16.mxu0 0
        %1402 = vmatpush1.bf16.msra.mxu0 0
        %1403 = vmatprep.subr.bf16.mxu0 0
        %1404 = vmatpush1.bf16.msra.mxu0 %v1387
        %1405 = vmatprep.subr.bf16.mxu0 0
        %1406 = vmatpush2.bf16.msra.mxu0 0
        %1407 = vmatprep.subr.bf16.mxu0 0
        %1408 = vmatpush2.bf16.msra.mxu0 0
        %1409 = vmatprep.subr.bf16.mxu0 0
        %1410 = vmatpush2.bf16.msra.mxu0 0
        %1411 = vmatprep.subr.bf16.mxu0 0
        %1412 = vmatpush2.bf16.msra.mxu0 0
        %1413 = vmatprep.subr.bf16.mxu0 0
        %1414 = vmatpush2.bf16.msra.mxu0 0
        %1415 = vmatprep.subr.bf16.mxu0 0
        %1416 = vmatpush2.bf16.msra.mxu0 0
        %1417 = vmatprep.subr.bf16.mxu0 0
        %1418 = vmatpush2.bf16.msra.mxu0 0
        %1419 = vmatprep.subr.bf16.mxu0 0
        %1420 = vmatpush2.bf16.msra.mxu0 0
        %1421 = vmatprep.mubr.bf16.mxu0 0
        %1422 = vmatmul.mubr.bf16.gmra.mxu0 %v1384
        %v1423 = vpop.f32.mrf.mxu0
        %v1424 = vadd.f32 0.0, %v1423
        %v1425 = vpop.f32.mrf.mxu0
        %v1426 = vpop.f32.mrf.mxu0
        %v1427 = vadd.f32 0.0, %v1426
        %v1428 = vpop.f32.mrf.mxu0
        %1429 = vdwg.mxu0
        %v1430 = vadd.f32 %v1059, %v1424
        %v1431 = vadd.f32 %v1062, %v1427
        %s1432 = scalar_lea.vmem %s1, 48
        %v1433 = vld [vmem:[%s1432] sm:$0xf]
        %v1434 = vld [vmem:[%s1432 + $0x4] sm:$0xf]
        %v1435 = vld [vmem:[%s1432 + $0x8] sm:$0xf]
        %v1436 = vld [vmem:[%s1432 + $0xc] sm:$0xf]
        %s1437 = scalar_lea.vmem %s4, 3
        %v1438 = vld [vmem:[%s1437] sm:$0x1]
        %v1440 = vlaneseq
        %v1441 = vshrl.u32 %v1440, 7
        %v1442 = vsub.s32 0, %v1441
        %v1443 = vrot.slane %v1438, %v1442
        %v1449 = vunpack.c.l.b16 %v1433
        %v1450 = vunpack.c.l.b16 %v1434
        %v1451 = vunpack.c.l.b16 %v1435
        %v1452 = vunpack.c.l.b16 %v1436
        %v1453 = vpack.c.b16 %v1450, %v1449
        %v1454 = vpack.c.b16 %v1452, %v1451
        %1457 = vmatprep.subr.bf16.mxu0 0
        %1458 = vmatpush1.bf16.msra.mxu0 0
        %1459 = vmatprep.subr.bf16.mxu0 0
        %1460 = vmatpush1.bf16.msra.mxu0 0
        %1461 = vmatprep.subr.bf16.mxu0 0
        %1462 = vmatpush1.bf16.msra.mxu0 0
        %1463 = vmatprep.subr.bf16.mxu0 0
        %1464 = vmatpush1.bf16.msra.mxu0 0
        %1465 = vmatprep.subr.bf16.mxu0 0
        %1466 = vmatpush1.bf16.msra.mxu0 0
        %1467 = vmatprep.subr.bf16.mxu0 0
        %1468 = vmatpush1.bf16.msra.mxu0 0
        %1469 = vmatprep.subr.bf16.mxu0 0
        %1470 = vmatpush1.bf16.msra.mxu0 %v1454
        %1471 = vmatprep.subr.bf16.mxu0 0
        %1472 = vmatpush1.bf16.msra.mxu0 %v1453
        %1473 = vmatprep.subr.bf16.mxu0 0
        %1474 = vmatpush2.bf16.msra.mxu0 0
        %1475 = vmatprep.subr.bf16.mxu0 0
        %1476 = vmatpush2.bf16.msra.mxu0 0
        %1477 = vmatprep.subr.bf16.mxu0 0
        %1478 = vmatpush2.bf16.msra.mxu0 0
        %1479 = vmatprep.subr.bf16.mxu0 0
        %1480 = vmatpush2.bf16.msra.mxu0 0
        %1481 = vmatprep.subr.bf16.mxu0 0
        %1482 = vmatpush2.bf16.msra.mxu0 0
        %1483 = vmatprep.subr.bf16.mxu0 0
        %1484 = vmatpush2.bf16.msra.mxu0 0
        %1485 = vmatprep.subr.bf16.mxu0 0
        %1486 = vmatpush2.bf16.msra.mxu0 0
        %1487 = vmatprep.subr.bf16.mxu0 0
        %1488 = vmatpush2.bf16.msra.mxu0 0
        %1489 = vmatprep.mubr.bf16.mxu0 0
        %1490 = vmatmul.mubr.bf16.gmra.mxu0 %v360
        %v1491 = vpop.f32.mrf.mxu0
        %v1492 = vadd.f32 %v1443, %v1491
        %v1493 = vpop.f32.mrf.mxu0
        %v1494 = vpop.f32.mrf.mxu0
        %v1495 = vadd.f32 %v1443, %v1494
        %v1496 = vpop.f32.mrf.mxu0
        %1497 = vdwg.mxu0
        %s1498 = scalar_lea.vmem %s2, 48
        %v1499 = vld [vmem:[%s1498] sm:$0xf]
        %v1500 = vld [vmem:[%s1498 + $0x4] sm:$0xf]
        %v1501 = vld [vmem:[%s1498 + $0x8] sm:$0xf]
        %v1502 = vld [vmem:[%s1498 + $0xc] sm:$0xf]
        %s1503 = scalar_lea.vmem %s5, 3
        %v1504 = vld [vmem:[%s1503] sm:$0x1]
        %v1506 = vlaneseq
        %v1507 = vshrl.u32 %v1506, 7
        %v1508 = vsub.s32 0, %v1507
        %v1509 = vrot.slane %v1504, %v1508
        %v1515 = vunpack.c.l.b16 %v1499
        %v1516 = vunpack.c.l.b16 %v1500
        %v1517 = vunpack.c.l.b16 %v1501
        %v1518 = vunpack.c.l.b16 %v1502
        %v1519 = vpack.c.b16 %v1516, %v1515
        %v1520 = vpack.c.b16 %v1518, %v1517
        %1523 = vmatprep.subr.bf16.mxu0 0
        %1524 = vmatpush1.bf16.msra.mxu0 0
        %1525 = vmatprep.subr.bf16.mxu0 0
        %1526 = vmatpush1.bf16.msra.mxu0 0
        %1527 = vmatprep.subr.bf16.mxu0 0
        %1528 = vmatpush1.bf16.msra.mxu0 0
        %1529 = vmatprep.subr.bf16.mxu0 0
        %1530 = vmatpush1.bf16.msra.mxu0 0
        %1531 = vmatprep.subr.bf16.mxu0 0
        %1532 = vmatpush1.bf16.msra.mxu0 0
        %1533 = vmatprep.subr.bf16.mxu0 0
        %1534 = vmatpush1.bf16.msra.mxu0 0
        %1535 = vmatprep.subr.bf16.mxu0 0
        %1536 = vmatpush1.bf16.msra.mxu0 %v1520
        %1537 = vmatprep.subr.bf16.mxu0 0
        %1538 = vmatpush1.bf16.msra.mxu0 %v1519
        %1539 = vmatprep.subr.bf16.mxu0 0
        %1540 = vmatpush2.bf16.msra.mxu0 0
        %1541 = vmatprep.subr.bf16.mxu0 0
        %1542 = vmatpush2.bf16.msra.mxu0 0
        %1543 = vmatprep.subr.bf16.mxu0 0
        %1544 = vmatpush2.bf16.msra.mxu0 0
        %1545 = vmatprep.subr.bf16.mxu0 0
        %1546 = vmatpush2.bf16.msra.mxu0 0
        %1547 = vmatprep.subr.bf16.mxu0 0
        %1548 = vmatpush2.bf16.msra.mxu0 0
        %1549 = vmatprep.subr.bf16.mxu0 0
        %1550 = vmatpush2.bf16.msra.mxu0 0
        %1551 = vmatprep.subr.bf16.mxu0 0
        %1552 = vmatpush2.bf16.msra.mxu0 0
        %1553 = vmatprep.subr.bf16.mxu0 0
        %1554 = vmatpush2.bf16.msra.mxu0 0
        %1555 = vmatprep.mubr.bf16.mxu0 0
        %1556 = vmatmul.mubr.bf16.gmra.mxu0 %v360
        %v1557 = vpop.f32.mrf.mxu0
        %v1558 = vadd.f32 %v1509, %v1557
        %v1559 = vpop.f32.mrf.mxu0
        %v1560 = vpop.f32.mrf.mxu0
        %v1561 = vadd.f32 %v1509, %v1560
        %v1562 = vpop.f32.mrf.mxu0
        %1563 = vdwg.mxu0
        %s1564 = scalar_lea.vmem %s3, 48
        %v1565 = vld [vmem:[%s1564] sm:$0xf]
        %v1566 = vld [vmem:[%s1564 + $0x4] sm:$0xf]
        %v1567 = vld [vmem:[%s1564 + $0x8] sm:$0xf]
        %v1568 = vld [vmem:[%s1564 + $0xc] sm:$0xf]
        %s1569 = scalar_lea.vmem %s6, 3
        %v1570 = vld [vmem:[%s1569] sm:$0x1]
        %v1572 = vlaneseq
        %v1573 = vshrl.u32 %v1572, 7
        %v1574 = vsub.s32 0, %v1573
        %v1575 = vrot.slane %v1570, %v1574
        %v1581 = vunpack.c.l.b16 %v1565
        %v1582 = vunpack.c.l.b16 %v1566
        %v1583 = vunpack.c.l.b16 %v1567
        %v1584 = vunpack.c.l.b16 %v1568
        %v1585 = vpack.c.b16 %v1582, %v1581
        %v1586 = vpack.c.b16 %v1584, %v1583
        %1589 = vmatprep.subr.bf16.mxu0 0
        %1590 = vmatpush1.bf16.msra.mxu0 0
        %1591 = vmatprep.subr.bf16.mxu0 0
        %1592 = vmatpush1.bf16.msra.mxu0 0
        %1593 = vmatprep.subr.bf16.mxu0 0
        %1594 = vmatpush1.bf16.msra.mxu0 0
        %1595 = vmatprep.subr.bf16.mxu0 0
        %1596 = vmatpush1.bf16.msra.mxu0 0
        %1597 = vmatprep.subr.bf16.mxu0 0
        %1598 = vmatpush1.bf16.msra.mxu0 0
        %1599 = vmatprep.subr.bf16.mxu0 0
        %1600 = vmatpush1.bf16.msra.mxu0 0
        %1601 = vmatprep.subr.bf16.mxu0 0
        %1602 = vmatpush1.bf16.msra.mxu0 %v1586
        %1603 = vmatprep.subr.bf16.mxu0 0
        %1604 = vmatpush1.bf16.msra.mxu0 %v1585
        %1605 = vmatprep.subr.bf16.mxu0 0
        %1606 = vmatpush2.bf16.msra.mxu0 0
        %1607 = vmatprep.subr.bf16.mxu0 0
        %1608 = vmatpush2.bf16.msra.mxu0 0
        %1609 = vmatprep.subr.bf16.mxu0 0
        %1610 = vmatpush2.bf16.msra.mxu0 0
        %1611 = vmatprep.subr.bf16.mxu0 0
        %1612 = vmatpush2.bf16.msra.mxu0 0
        %1613 = vmatprep.subr.bf16.mxu0 0
        %1614 = vmatpush2.bf16.msra.mxu0 0
        %1615 = vmatprep.subr.bf16.mxu0 0
        %1616 = vmatpush2.bf16.msra.mxu0 0
        %1617 = vmatprep.subr.bf16.mxu0 0
        %1618 = vmatpush2.bf16.msra.mxu0 0
        %1619 = vmatprep.subr.bf16.mxu0 0
        %1620 = vmatpush2.bf16.msra.mxu0 0
        %1621 = vmatprep.mubr.bf16.mxu0 0
        %1622 = vmatmul.mubr.bf16.gmra.mxu0 %v360
        %v1623 = vpop.f32.mrf.mxu0
        %v1624 = vadd.f32 %v1575, %v1623
        %v1625 = vpop.f32.mrf.mxu0
        %v1626 = vpop.f32.mrf.mxu0
        %v1627 = vadd.f32 %v1575, %v1626
        %v1628 = vpop.f32.mrf.mxu0
        %1629 = vdwg.mxu0
        %v1630 = vpack.c.bf16 %v1495, %v1492
        %v1631 = vpack.c.bf16 %v1561, %v1558
        %v1633 = vsel %vm533, %v1630, 0
        %v1636 = vsel %vm533, %v1631, 0
        %1638 = vmatprep.subr.bf16.mxu0 0
        %1639 = vmatpush1.bf16.xpose.msra.mxu0 0
        %1640 = vmatprep.subr.bf16.mxu0 0
        %1641 = vmatpush1.bf16.xpose.msra.mxu0 0
        %1642 = vmatprep.subr.bf16.mxu0 0
        %1643 = vmatpush1.bf16.xpose.msra.mxu0 0
        %1644 = vmatprep.subr.bf16.mxu0 0
        %1645 = vmatpush1.bf16.xpose.msra.mxu0 0
        %1646 = vmatprep.subr.bf16.mxu0 0
        %1647 = vmatpush1.bf16.xpose.msra.mxu0 0
        %1648 = vmatprep.subr.bf16.mxu0 0
        %1649 = vmatpush1.bf16.xpose.msra.mxu0 0
        %1650 = vmatprep.subr.bf16.mxu0 0
        %1651 = vmatpush1.bf16.xpose.msra.mxu0 0
        %1652 = vmatprep.subr.bf16.mxu0 0
        %1653 = vmatpush1.bf16.xpose.msra.mxu0 %v1636
        %1654 = vmatprep.subr.bf16.mxu0 0
        %1655 = vmatpush2.bf16.xpose.msra.mxu0 0
        %1656 = vmatprep.subr.bf16.mxu0 0
        %1657 = vmatpush2.bf16.xpose.msra.mxu0 0
        %1658 = vmatprep.subr.bf16.mxu0 0
        %1659 = vmatpush2.bf16.xpose.msra.mxu0 0
        %1660 = vmatprep.subr.bf16.mxu0 0
        %1661 = vmatpush2.bf16.xpose.msra.mxu0 0
        %1662 = vmatprep.subr.bf16.mxu0 0
        %1663 = vmatpush2.bf16.xpose.msra.mxu0 0
        %1664 = vmatprep.subr.bf16.mxu0 0
        %1665 = vmatpush2.bf16.xpose.msra.mxu0 0
        %1666 = vmatprep.subr.bf16.mxu0 0
        %1667 = vmatpush2.bf16.xpose.msra.mxu0 0
        %1668 = vmatprep.subr.bf16.mxu0 0
        %1669 = vmatpush2.bf16.xpose.msra.mxu0 0
        %1670 = vmatprep.mubr.bf16.mxu0 0
        %1671 = vmatmul.mubr.bf16.gmra.mxu0 %v1633
        %v1672 = vpop.f32.mrf.mxu0
        %v1673 = vadd.f32 0.0, %v1672
        %v1674 = vpop.f32.mrf.mxu0
        %v1675 = vpop.f32.mrf.mxu0
        %v1676 = vadd.f32 0.0, %v1675
        %v1677 = vpop.f32.mrf.mxu0
        %1678 = vdwg.mxu0
        %v1679 = vsel %vm581, %v1673, -inf
        %1680 = vmax.xlane.f32.xlu0 %v1679
        %v1681 = vpop.xlane.xlu0 %1680
        %v1682 = vsel %vm581, %v1676, -inf
        %1683 = vmax.xlane.f32.xlu0 %v1682
        %v1684 = vpop.xlane.xlu0 %1683
        %v1685 = vsub.f32 %v1673, %v1681
        %v1686 = vsub.f32 %v1676, %v1684
        %v1687 = vmul.f32 %v1685, 1.442695
        %v1688 = vpow.pop %v1687
        %v1689 = vmul.f32 %v1686, 1.442695
        %v1690 = vpow.pop %v1689
        %v1691 = vsel %vm581, %v1688, 0.0
        %1692 = vadd.xlane.f32.xlu0 %v1691
        %v1693 = vpop.xlane.xlu0 %1692
        %v1694 = vsel %vm581, %v1690, 0.0
        %1695 = vadd.xlane.f32.xlu0 %v1694
        %v1696 = vpop.xlane.xlu0 %1695
        %v1697 = vrcp.pop %v1693
        %v1698 = vrcp.pop %v1696
        %v1699 = vmul.f32 %v1688, %v1697
        %v1700 = vmul.f32 %v1690, %v1698
        %v1701 = vpack.c.bf16 %v1700, %v1699
        %v1702 = vpack.c.bf16 %v1627, %v1624
        %v1704 = vsel %vm581, %v1701, 0
        %1706 = vmatprep.subr.bf16.mxu0 0
        %1707 = vmatpush1.bf16.msra.mxu0 0
        %1708 = vmatprep.subr.bf16.mxu0 0
        %1709 = vmatpush1.bf16.msra.mxu0 0
        %1710 = vmatprep.subr.bf16.mxu0 0
        %1711 = vmatpush1.bf16.msra.mxu0 0
        %1712 = vmatprep.subr.bf16.mxu0 0
        %1713 = vmatpush1.bf16.msra.mxu0 0
        %1714 = vmatprep.subr.bf16.mxu0 0
        %1715 = vmatpush1.bf16.msra.mxu0 0
        %1716 = vmatprep.subr.bf16.mxu0 0
        %1717 = vmatpush1.bf16.msra.mxu0 0
        %1718 = vmatprep.subr.bf16.mxu0 0
        %1719 = vmatpush1.bf16.msra.mxu0 0
        %1720 = vmatprep.subr.bf16.mxu0 0
        %1721 = vmatpush1.bf16.msra.mxu0 %v1702
        %1722 = vmatprep.subr.bf16.mxu0 0
        %1723 = vmatpush2.bf16.msra.mxu0 0
        %1724 = vmatprep.subr.bf16.mxu0 0
        %1725 = vmatpush2.bf16.msra.mxu0 0
        %1726 = vmatprep.subr.bf16.mxu0 0
        %1727 = vmatpush2.bf16.msra.mxu0 0
        %1728 = vmatprep.subr.bf16.mxu0 0
        %1729 = vmatpush2.bf16.msra.mxu0 0
        %1730 = vmatprep.subr.bf16.mxu0 0
        %1731 = vmatpush2.bf16.msra.mxu0 0
        %1732 = vmatprep.subr.bf16.mxu0 0
        %1733 = vmatpush2.bf16.msra.mxu0 0
        %1734 = vmatprep.subr.bf16.mxu0 0
        %1735 = vmatpush2.bf16.msra.mxu0 0
        %1736 = vmatprep.subr.bf16.mxu0 0
        %1737 = vmatpush2.bf16.msra.mxu0 0
        %1738 = vmatprep.mubr.bf16.mxu0 0
        %1739 = vmatmul.mubr.bf16.gmra.mxu0 %v1704
        %v1740 = vpop.f32.mrf.mxu0
        %v1741 = vadd.f32 0.0, %v1740
        %v1742 = vpop.f32.mrf.mxu0
        %v1743 = vpop.f32.mrf.mxu0
        %v1744 = vadd.f32 0.0, %v1743
        %v1745 = vpop.f32.mrf.mxu0
        %1746 = vdwg.mxu0
        %v1747 = vpack.c.bf16 %v1744, %v1741
        %s1748 = scalar_lea.vmem %s7, 12
        %v1749 = vld [vmem:[%s1748] sm:$0xf]
        %v1751 = vsel %vm533, %v1747, 0
        %v1754 = vsel %vm973, %v1749, 0
        %1756 = vmatprep.subr.bf16.mxu0 0
        %1757 = vmatpush1.bf16.msra.mxu0 0
        %1758 = vmatprep.subr.bf16.mxu0 0
        %1759 = vmatpush1.bf16.msra.mxu0 0
        %1760 = vmatprep.subr.bf16.mxu0 0
        %1761 = vmatpush1.bf16.msra.mxu0 0
        %1762 = vmatprep.subr.bf16.mxu0 0
        %1763 = vmatpush1.bf16.msra.mxu0 0
        %1764 = vmatprep.subr.bf16.mxu0 0
        %1765 = vmatpush1.bf16.msra.mxu0 0
        %1766 = vmatprep.subr.bf16.mxu0 0
        %1767 = vmatpush1.bf16.msra.mxu0 0
        %1768 = vmatprep.subr.bf16.mxu0 0
        %1769 = vmatpush1.bf16.msra.mxu0 0
        %1770 = vmatprep.subr.bf16.mxu0 0
        %1771 = vmatpush1.bf16.msra.mxu0 %v1754
        %1772 = vmatprep.subr.bf16.mxu0 0
        %1773 = vmatpush2.bf16.msra.mxu0 0
        %1774 = vmatprep.subr.bf16.mxu0 0
        %1775 = vmatpush2.bf16.msra.mxu0 0
        %1776 = vmatprep.subr.bf16.mxu0 0
        %1777 = vmatpush2.bf16.msra.mxu0 0
        %1778 = vmatprep.subr.bf16.mxu0 0
        %1779 = vmatpush2.bf16.msra.mxu0 0
        %1780 = vmatprep.subr.bf16.mxu0 0
        %1781 = vmatpush2.bf16.msra.mxu0 0
        %1782 = vmatprep.subr.bf16.mxu0 0
        %1783 = vmatpush2.bf16.msra.mxu0 0
        %1784 = vmatprep.subr.bf16.mxu0 0
        %1785 = vmatpush2.bf16.msra.mxu0 0
        %1786 = vmatprep.subr.bf16.mxu0 0
        %1787 = vmatpush2.bf16.msra.mxu0 0
        %1788 = vmatprep.mubr.bf16.mxu0 0
        %1789 = vmatmul.mubr.bf16.gmra.mxu0 %v1751
        %v1790 = vpop.f32.mrf.mxu0
        %v1791 = vadd.f32 0.0, %v1790
        %v1792 = vpop.f32.mrf.mxu0
        %v1793 = vpop.f32.mrf.mxu0
        %v1794 = vadd.f32 0.0, %v1793
        %v1795 = vpop.f32.mrf.mxu0
        %1796 = vdwg.mxu0
        %v1797 = vadd.f32 %v1430, %v1791
        %v1798 = vadd.f32 %v1431, %v1794
        %v1799 = vld [vmem:[%s8] sm:$0x1]
        %v1801 = vlaneseq
        %v1802 = vshrl.u32 %v1801, 7
        %v1803 = vsub.s32 0, %v1802
        %v1804 = vrot.slane %v1799, %v1803
        %v1806 = vadd.f32 %v1797, %v1804
        %v1807 = vadd.f32 %v1798, %v1804
        %1808 = vst.msk [vmem:[%s325] sm:$0xff] %vm358, %v1806
        %1809 = vst.msk [vmem:[%s325 + $0x8] sm:$0xff] %vm358, %v1807
        %s1810 = sand.u32 %s225, 1
        %s1811 = scalar_lea.sflag [#allocation3], %s1810
        %s1812 = sand.u32 %s225, 1
        %s1813 = smul.addr %s1812, 16
        %s1814 = scalar_lea.vmem [#allocation2], %s1813
        // Predicated region
        $region57: #{tpu_custom_call.1} parent=55 // pred_check
          %p1815 = pneg %p235
        $region58: #{tpu_custom_call.1} parent=55 // pred_check_branch
          %1817 = sbr.rel (%p1815) target = $region60
        $region59: #{tpu_custom_call.1} parent=55 // pred_region
          %s1819 = ssub.s32 256, 256
          %1820 = vsyncadd %s1811, %s1819
          %s1821 = smul.addr %s23, 2
          %s1822 = smul.addr %s1821, 128
          %s1823 = scalar_lea.hbm %s9, %s1822
          %s1824 = sshll.u32 %s1814, 4
          %s1825 = int_to_ptr.vmem [resolvable:$true] %s1824
          %1830 = dma.vmem_to_hbm [thread:$0]  %s1825, 256, %s1823, %s1811, 128, 128, 8
        $region60: #{tpu_custom_call.1} parent=55 // pred_fallthru
          _
      $region56: #{tpu_custom_call.1} parent=5 // pred_fallthru
        _
      %p1831 = scmp.le.s32.totalorder 2, %s18
      // Predicated region
      $region61: #{tpu_custom_call.1} parent=5 // pred_check
        %p1832 = pneg %p1831
      $region62: #{tpu_custom_call.1} parent=5 // pred_check_branch
        %1834 = sbr.rel (%p1832) target = $region64
      $region63: #{tpu_custom_call.1} parent=5 // pred_region
        %s1835 = ssub.s32 %s18, 2
        // Predicated region
        $region65: #{tpu_custom_call.1} parent=63 // pred_check
          %p1836 = pneg %p241
        $region66: #{tpu_custom_call.1} parent=63 // pred_check_branch
          %1838 = sbr.rel (%p1836) target = $region68
        $region67: #{tpu_custom_call.1} parent=63 // pred_region
          %s1839 = sand.u32 %s226, 1
          %s1840 = scalar_lea.sflag [#allocation3], %s1839
          %s1841 = sand.u32 %s226, 1
          %s1842 = smul.addr %s1841, 16
          %s1843 = scalar_lea.vmem [#allocation2], %s1842
          %1844 = dma.done %s1840, 256
        $region68: #{tpu_custom_call.1} parent=63 // pred_fallthru
          _
      $region64: #{tpu_custom_call.1} parent=5 // pred_fallthru
        _
    $region6: #{tpu_custom_call.1} parent=1 // loop_footer
      %s22 = sadd.s32 1, %s18
    $region7: #{tpu_custom_call.1} parent=1 // loop_footer_branch
      %17 = sbr.rel target = $region3
    $region8: #{tpu_custom_call.1} parent=1 // loop_exit
      _
    %1845 = vsyncpa [#allocation3], 1
    %s1846 = scalar_lea.sflag [#allocation3], 1
    %1847 = vsyncpa %s1846, 1

</llo_original>
